<compile_context>
chip_gen: v6e
topology: v6e:2x2x1
jax: 0.10.0
libtpu: 0.0.40
codegen_flags: <defaults>
</compile_context>

<pallas_src>
import functools

import jax
import jax.numpy as jnp
from jax.experimental import pallas as pl
from jax.experimental.pallas import tpu as pltpu

TM_MAX = 512          # im2col rows per grid step (mem-bound sweet spot)
LANE = 128            # lane-axis alignment target (also right for v5e)
BN_EPS = 1e-5
LRELU_SLOPE = 0.1


def _round_up(x, m):
    return (x + m - 1) // m * m


# ----------------------------------------------------------------------------
# Fused kernel
#   pass 0 (p==0): matmul tile + accumulate per-channel sum / sum-of-squares
#   pass 1 (p==1): recompute matmul tile, apply BN affine + LeakyReLU, store
# ----------------------------------------------------------------------------
def _fused_kernel(p_ref, w_ref, g_ref, b_ref, o_ref,
                  sum_acc, ssq_acc, scale_sc, shift_sc, *, inv_cnt):
    p = pl.program_id(0)          # 0 = stats pass, 1 = apply pass
    i = pl.program_id(1)          # row-tile index

    # (TM, Kp) bf16 @ (Kp, Cp) bf16 -> (TM, Cp) f32 on the MXU.
    y = jnp.dot(p_ref[...], w_ref[...], preferred_element_type=jnp.float32)

    @pl.when((p == 0) & (i == 0))
    def _():
        sum_acc[...] = jnp.zeros_like(sum_acc)
        ssq_acc[...] = jnp.zeros_like(ssq_acc)

    @pl.when(p == 0)
    def _():
        # Zero-padded rows contribute 0 to both accumulators.
        sum_acc[...] += jnp.sum(y, axis=0, keepdims=True)
        ssq_acc[...] += jnp.sum(y * y, axis=0, keepdims=True)

    @pl.when((p == 1) & (i == 0))
    def _():
        # Batch statistics over all m_true rows (biased var, like BatchNorm2d
        # uses for normalization in training mode).
        mean = sum_acc[...] * inv_cnt
        var = jnp.maximum(ssq_acc[...] * inv_cnt - mean * mean, 0.0)
        scale = g_ref[...] * jax.lax.rsqrt(var + BN_EPS)
        scale_sc[...] = scale
        shift_sc[...] = b_ref[...] - mean * scale

    @pl.when(p == 1)
    def _():
        z = y * scale_sc[...] + shift_sc[...]
        o_ref[...] = jnp.where(z >= 0, z, LRELU_SLOPE * z)


def _fused_conv_bn_lrelu(patches, w_mat, gamma2d, beta2d, m_true, tm):
    """patches: (M_pad, K_pad) bf16; w_mat: (K_pad, C_pad) bf16 -> (M_pad, C_pad) f32."""
    m_pad, k_pad = patches.shape
    c_pad = w_mat.shape[1]
    nt = m_pad // tm
    kernel = functools.partial(_fused_kernel, inv_cnt=1.0 / float(m_true))

    # Advisory cost hint for XLA's scheduler (matmul runs twice).
    flops = 2 * (2 * m_pad * k_pad * c_pad)
    bytes_accessed = (2 * m_pad * k_pad * 2      # patches read twice (bf16)
                      + k_pad * c_pad * 2        # weights (bf16, resident)
                      + m_pad * c_pad * 4)       # f32 output write

    return pl.pallas_call(
        kernel,
        out_shape=jax.ShapeDtypeStruct((m_pad, c_pad), jnp.float32),
        grid_spec=pltpu.PrefetchScalarGridSpec(
            num_scalar_prefetch=0,
            grid=(2, nt),
            in_specs=[
                pl.BlockSpec((tm, k_pad), lambda p, i: (i, 0)),       # im2col rows
                pl.BlockSpec((k_pad, c_pad), lambda p, i: (0, 0)),    # resident weights
                pl.BlockSpec((1, c_pad), lambda p, i: (0, 0)),        # gamma
                pl.BlockSpec((1, c_pad), lambda p, i: (0, 0)),        # beta
            ],
            # During pass 0 the index stays (0, 0) and the kernel never writes,
            # so no writeback happens; real data lands during pass 1.
            out_specs=pl.BlockSpec((tm, c_pad), lambda p, i: (i * p, 0)),
            scratch_shapes=[
                pltpu.VMEM((1, c_pad), jnp.float32),   # channel sum
                pltpu.VMEM((1, c_pad), jnp.float32),   # channel sum of squares
                pltpu.VMEM((1, c_pad), jnp.float32),   # BN scale
                pltpu.VMEM((1, c_pad), jnp.float32),   # BN shift
            ],
        ),
        compiler_params=pltpu.CompilerParams(
            dimension_semantics=("arbitrary", "arbitrary"),
            vmem_limit_bytes=64 * 1024 * 1024,
        ),
        cost_estimate=pl.CostEstimate(flops=flops, transcendentals=0,
                                      bytes_accessed=bytes_accessed),
    )(patches, w_mat, gamma2d, beta2d)


# ----------------------------------------------------------------------------
# Glue: channels-last im2col, padding, reshapes
# ----------------------------------------------------------------------------
def _im2col_nhwc(x_nchw, kh, kw, stride, pad, k_pad):
    """(N, C, H, W) -> (N*Ho*Wo, K_pad) with K index = (ki*kw + kj)*C + c."""
    n, c, h, w = x_nchw.shape
    ho = (h + 2 * pad - kh) // stride + 1
    wo = (w + 2 * pad - kw) // stride + 1
    x = jnp.transpose(x_nchw, (0, 2, 3, 1))                      # NHWC (small pass)
    xp = jnp.pad(x, ((0, 0), (pad, pad), (pad, pad), (0, 0)))
    pieces = []
    for ki in range(kh):
        for kj in range(kw):
            pieces.append(
                xp[:, ki:ki + ho * stride:stride, kj:kj + wo * stride:stride, :])
    k = kh * kw * c
    if k_pad > k:
        pieces.append(jnp.zeros((n, ho, wo, k_pad - k), x.dtype))
    cols = jnp.concatenate(pieces, axis=-1)                      # (N, Ho, Wo, K_pad)
    return cols.reshape(n * ho * wo, k_pad), ho, wo


@functools.partial(jax.jit, static_argnames=("stride", "pad"))
def cnn_block_forward(x, conv_w, gamma, beta, *, stride, pad):
    """x: (N, Cin, H, W); conv_w: (Cout, Cin, kh, kw) — returns NCHW f32."""
    n = x.shape[0]
    c_out, c_in, kh, kw = conv_w.shape
    k = c_in * kh * kw
    k_pad = _round_up(k, LANE)
    c_pad = _round_up(c_out, LANE)

    # bf16 MXU operands (halves the im2col DMA stream); f32 accumulation in-kernel.
    xb = x.astype(jnp.bfloat16)
    patches, ho, wo = _im2col_nhwc(xb, kh, kw, stride, pad, k_pad)

    m_true = n * ho * wo
    tm = TM_MAX if m_true >= TM_MAX else _round_up(m_true, 8)
    m_pad = _round_up(m_true, tm)
    if m_pad > m_true:
        patches = jnp.pad(patches, ((0, m_pad - m_true), (0, 0)))  # zero rows -> 0 stats

    # OIHW -> (kh, kw, Cin, Cout) to match the patch K-ordering, pad to lanes.
    w_mat = conv_w.transpose(2, 3, 1, 0).reshape(k, c_out)
    w_mat = jnp.pad(w_mat, ((0, k_pad - k), (0, c_pad - c_out))).astype(jnp.bfloat16)

    gamma2d = jnp.pad(gamma.astype(jnp.float32).reshape(1, c_out),
                      ((0, 0), (0, c_pad - c_out)))
    beta2d = jnp.pad(beta.astype(jnp.float32).reshape(1, c_out),
                     ((0, 0), (0, c_pad - c_out)))

    out = _fused_conv_bn_lrelu(patches, w_mat, gamma2d, beta2d, m_true, tm)

    out = out[:m_true, :c_out].reshape(n, ho, wo, c_out)
    # NCHW to match the PyTorch API boundary; drop this transpose if the
    # downstream consumer accepts NHWC.
    return out.transpose(0, 3, 1, 2)
    # TODO(synk): BatchNorm2d running_mean/running_var momentum updates (training
    # side effect) are not reproduced; only the forward activation is computed.


# ----------------------------------------------------------------------------
# Reference (plain JAX, f32) for a correctness check
# ----------------------------------------------------------------------------
def cnn_block_reference(x, conv_w, gamma, beta, stride, pad):
    y = jax.lax.conv_general_dilated(
        x, conv_w, (stride, stride), [(pad, pad), (pad, pad)],
        dimension_numbers=("NCHW", "OIHW", "NCHW"))
    mean = y.mean(axis=(0, 2, 3), keepdims=True)
    var = y.var(axis=(0, 2, 3), keepdims=True)
    z = (y - mean) / jnp.sqrt(var + BN_EPS)
    z = z * gamma[None, :, None, None] + beta[None, :, None, None]
    return jnp.where(z >= 0, z, LRELU_SLOPE * z)


if __name__ == "__main__":
    # CNNBlock(in_channels=4, out_channels=8, kernel_size=3, stride=1, padding=1)
    N, C_IN, H, W = 2, 4, 16, 16
    C_OUT, KH, KW = 8, 3, 3
    STRIDE, PAD = 1, 1

    key = jax.random.PRNGKey(0)
    kx, kw_ = jax.random.split(key)
    x = jax.random.normal(kx, (N, C_IN, H, W), dtype=jnp.float32)
    conv_w = jax.random.normal(kw_, (C_OUT, C_IN, KH, KW), dtype=jnp.float32) * 0.1
    gamma = jnp.ones((C_OUT,), jnp.float32)   # BatchNorm2d default affine init
    beta = jnp.zeros((C_OUT,), jnp.float32)

    out = cnn_block_forward(x, conv_w, gamma, beta, stride=STRIDE, pad=PAD)
    out = jax.block_until_ready(out)

    ref = cnn_block_reference(x, conv_w, gamma, beta, STRIDE, PAD)
    assert out.shape == (N, C_OUT, H, W), out.shape
    # bf16 MXU operands vs f32 reference -> loosened tolerance.
    max_err = float(jnp.max(jnp.abs(out - ref)))
    assert jnp.allclose(out, ref, atol=5e-2, rtol=5e-2), max_err

    print("KERNEL_OK")
</pallas_src>

<mosaic_0001>
module attributes {stable_mosaic.version = 11 : i64} {
  func.func @_fused_kernel(%arg0: i32, %arg1: i32, %arg2: memref<512x128xbf16, #tpu.memory_space<vmem>>, %arg3: memref<128x128xbf16, #tpu.memory_space<vmem>>, %arg4: memref<1x128xf32, #tpu.memory_space<vmem>>, %arg5: memref<1x128xf32, #tpu.memory_space<vmem>>, %arg6: memref<512x128xf32, #tpu.memory_space<vmem>>, %arg7: memref<1x128xf32, #tpu.memory_space<vmem>>, %arg8: memref<1x128xf32, #tpu.memory_space<vmem>>, %arg9: memref<1x128xf32, #tpu.memory_space<vmem>>, %arg10: memref<1x128xf32, #tpu.memory_space<vmem>>) attributes {dimension_semantics = [#tpu.dimension_semantics<arbitrary>, #tpu.dimension_semantics<arbitrary>], iteration_bounds = array<i64: 2, 1>, scalar_prefetch = 0 : i64, scratch_operands = 4 : i64, tpu.core_type = #tpu.core_type<tc>, window_params = [{transform_indices = @transform_0, window_bounds = array<i64: 512, 128>}, {pipeline_mode = #tpu.pipeline_mode<synchronous>, transform_indices = @transform_1, window_bounds = array<i64: 128, 128>}, {pipeline_mode = #tpu.pipeline_mode<synchronous>, transform_indices = @transform_2, window_bounds = array<i64: 1, 128>}, {pipeline_mode = #tpu.pipeline_mode<synchronous>, transform_indices = @transform_3, window_bounds = array<i64: 1, 128>}, {transform_indices = @transform_4, window_bounds = array<i64: 512, 128>}]} {
    %c0 = arith.constant 0 : index
    %c0_0 = arith.constant 0 : index
    %0 = vector.load %arg2[%c0, %c0_0] : memref<512x128xbf16, #tpu.memory_space<vmem>>, vector<512x128xbf16>
    %c0_1 = arith.constant 0 : index
    %c0_2 = arith.constant 0 : index
    %1 = vector.load %arg3[%c0_1, %c0_2] : memref<128x128xbf16, #tpu.memory_space<vmem>>, vector<128x128xbf16>
    %cst = arith.constant dense<0.000000e+00> : vector<512x128xf32>
    %2 = tpu.matmul %0, %1, %cst {dimension_numbers = #tpu.dot_dimension_numbers<[1], [0], [0], [1], [0, 0, 1, 1], [], []>} : vector<512x128xbf16>, vector<128x128xbf16>, vector<512x128xf32> -> vector<512x128xf32>
    %c0_i32 = arith.constant 0 : i32
    %3 = arith.cmpi eq, %arg0, %c0_i32 : i32
    %c0_i32_3 = arith.constant 0 : i32
    %4 = arith.cmpi eq, %arg1, %c0_i32_3 : i32
    %5 = arith.andi %3, %4 : i1
    %6 = arith.extui %5 : i1 to i32
    %c0_i32_4 = arith.constant 0 : i32
    %7 = arith.cmpi ne, %6, %c0_i32_4 : i32
    scf.if %7 {
      %cst_11 = arith.constant 0.000000e+00 : f32
      %19 = vector.broadcast %cst_11 : f32 to vector<1x128xf32>
      %c0_12 = arith.constant 0 : index
      %c0_13 = arith.constant 0 : index
      %20 = vector.load %arg7[%c0_12, %c0_13] : memref<1x128xf32, #tpu.memory_space<vmem>>, vector<1x128xf32>
      tpu.vector_store %arg7[%c0_12, %c0_13], %19 {strides = array<i32>} : memref<1x128xf32, #tpu.memory_space<vmem>>, vector<1x128xf32>,
      %cst_14 = arith.constant 0.000000e+00 : f32
      %21 = vector.broadcast %cst_14 : f32 to vector<1x128xf32>
      %c0_15 = arith.constant 0 : index
      %c0_16 = arith.constant 0 : index
      %22 = vector.load %arg8[%c0_15, %c0_16] : memref<1x128xf32, #tpu.memory_space<vmem>>, vector<1x128xf32>
      tpu.vector_store %arg8[%c0_15, %c0_16], %21 {strides = array<i32>} : memref<1x128xf32, #tpu.memory_space<vmem>>, vector<1x128xf32>,
    } else {
    }
    %c0_i32_5 = arith.constant 0 : i32
    %8 = arith.cmpi eq, %arg0, %c0_i32_5 : i32
    %9 = arith.extui %8 : i1 to i32
    %c0_i32_6 = arith.constant 0 : i32
    %10 = arith.cmpi ne, %9, %c0_i32_6 : i32
    scf.if %10 {
      %c0_11 = arith.constant 0 : index
      %c0_12 = arith.constant 0 : index
      %19 = vector.load %arg7[%c0_11, %c0_12] : memref<1x128xf32, #tpu.memory_space<vmem>>, vector<1x128xf32>
      %cst_13 = arith.constant dense<0.000000e+00> : vector<128xf32>
      %20 = vector.multi_reduction <add>, %2, %cst_13 [0] : vector<512x128xf32> to vector<128xf32>
      %21 = vector.shape_cast %20 : vector<128xf32> to vector<1x128xf32>
      %22 = arith.addf %19, %21 : vector<1x128xf32>
      %c0_14 = arith.constant 0 : index
      %c0_15 = arith.constant 0 : index
      %23 = vector.load %arg7[%c0_14, %c0_15] : memref<1x128xf32, #tpu.memory_space<vmem>>, vector<1x128xf32>
      tpu.vector_store %arg7[%c0_14, %c0_15], %22 {strides = array<i32>} : memref<1x128xf32, #tpu.memory_space<vmem>>, vector<1x128xf32>,
      %c0_16 = arith.constant 0 : index
      %c0_17 = arith.constant 0 : index
      %24 = vector.load %arg8[%c0_16, %c0_17] : memref<1x128xf32, #tpu.memory_space<vmem>>, vector<1x128xf32>
      %25 = arith.mulf %2, %2 : vector<512x128xf32>
      %cst_18 = arith.constant dense<0.000000e+00> : vector<128xf32>
      %26 = vector.multi_reduction <add>, %25, %cst_18 [0] : vector<512x128xf32> to vector<128xf32>
      %27 = vector.shape_cast %26 : vector<128xf32> to vector<1x128xf32>
      %28 = arith.addf %24, %27 : vector<1x128xf32>
      %c0_19 = arith.constant 0 : index
      %c0_20 = arith.constant 0 : index
      %29 = vector.load %arg8[%c0_19, %c0_20] : memref<1x128xf32, #tpu.memory_space<vmem>>, vector<1x128xf32>
      tpu.vector_store %arg8[%c0_19, %c0_20], %28 {strides = array<i32>} : memref<1x128xf32, #tpu.memory_space<vmem>>, vector<1x128xf32>,
    } else {
    }
    %c1_i32 = arith.constant 1 : i32
    %11 = arith.cmpi eq, %arg0, %c1_i32 : i32
    %c0_i32_7 = arith.constant 0 : i32
    %12 = arith.cmpi eq, %arg1, %c0_i32_7 : i32
    %13 = arith.andi %11, %12 : i1
    %14 = arith.extui %13 : i1 to i32
    %c0_i32_8 = arith.constant 0 : i32
    %15 = arith.cmpi ne, %14, %c0_i32_8 : i32
    scf.if %15 {
      %c0_11 = arith.constant 0 : index
      %c0_12 = arith.constant 0 : index
      %19 = vector.load %arg7[%c0_11, %c0_12] : memref<1x128xf32, #tpu.memory_space<vmem>>, vector<1x128xf32>
      %cst_13 = arith.constant 0.001953125 : f32
      %20 = vector.broadcast %cst_13 : f32 to vector<1x128xf32>
      %21 = arith.mulf %19, %20 : vector<1x128xf32>
      %c0_14 = arith.constant 0 : index
      %c0_15 = arith.constant 0 : index
      %22 = vector.load %arg8[%c0_14, %c0_15] : memref<1x128xf32, #tpu.memory_space<vmem>>, vector<1x128xf32>
      %cst_16 = arith.constant 0.001953125 : f32
      %23 = vector.broadcast %cst_16 : f32 to vector<1x128xf32>
      %24 = arith.mulf %22, %23 : vector<1x128xf32>
      %25 = arith.mulf %21, %21 : vector<1x128xf32>
      %26 = arith.subf %24, %25 : vector<1x128xf32>
      %cst_17 = arith.constant 0.000000e+00 : f32
      %27 = vector.broadcast %cst_17 : f32 to vector<1x128xf32>
      %28 = arith.maximumf %26, %27 : vector<1x128xf32>
      %c0_18 = arith.constant 0 : index
      %c0_19 = arith.constant 0 : index
      %29 = vector.load %arg4[%c0_18, %c0_19] : memref<1x128xf32, #tpu.memory_space<vmem>>, vector<1x128xf32>
      %cst_20 = arith.constant 9.99999974E-6 : f32
      %30 = vector.broadcast %cst_20 : f32 to vector<1x128xf32>
      %31 = arith.addf %28, %30 : vector<1x128xf32>
      %32 = math.rsqrt %31 : vector<1x128xf32>
      %33 = arith.mulf %29, %32 : vector<1x128xf32>
      %c0_21 = arith.constant 0 : index
      %c0_22 = arith.constant 0 : index
      %34 = vector.load %arg9[%c0_21, %c0_22] : memref<1x128xf32, #tpu.memory_space<vmem>>, vector<1x128xf32>
      tpu.vector_store %arg9[%c0_21, %c0_22], %33 {strides = array<i32>} : memref<1x128xf32, #tpu.memory_space<vmem>>, vector<1x128xf32>,
      %c0_23 = arith.constant 0 : index
      %c0_24 = arith.constant 0 : index
      %35 = vector.load %arg5[%c0_23, %c0_24] : memref<1x128xf32, #tpu.memory_space<vmem>>, vector<1x128xf32>
      %36 = arith.mulf %21, %33 : vector<1x128xf32>
      %37 = arith.subf %35, %36 : vector<1x128xf32>
      %c0_25 = arith.constant 0 : index
      %c0_26 = arith.constant 0 : index
      %38 = vector.load %arg10[%c0_25, %c0_26] : memref<1x128xf32, #tpu.memory_space<vmem>>, vector<1x128xf32>
      tpu.vector_store %arg10[%c0_25, %c0_26], %37 {strides = array<i32>} : memref<1x128xf32, #tpu.memory_space<vmem>>, vector<1x128xf32>,
    } else {
    }
    %c1_i32_9 = arith.constant 1 : i32
    %16 = arith.cmpi eq, %arg0, %c1_i32_9 : i32
    %17 = arith.extui %16 : i1 to i32
    %c0_i32_10 = arith.constant 0 : i32
    %18 = arith.cmpi ne, %17, %c0_i32_10 : i32
    scf.if %18 {
      %c0_11 = arith.constant 0 : index
      %c0_12 = arith.constant 0 : index
      %19 = vector.load %arg9[%c0_11, %c0_12] : memref<1x128xf32, #tpu.memory_space<vmem>>, vector<1x128xf32>
      %20 = vector.broadcast %19 : vector<1x128xf32> to vector<512x128xf32>
      %21 = arith.mulf %2, %20 : vector<512x128xf32>
      %c0_13 = arith.constant 0 : index
      %c0_14 = arith.constant 0 : index
      %22 = vector.load %arg10[%c0_13, %c0_14] : memref<1x128xf32, #tpu.memory_space<vmem>>, vector<1x128xf32>
      %23 = vector.broadcast %22 : vector<1x128xf32> to vector<512x128xf32>
      %24 = arith.addf %21, %23 : vector<512x128xf32>
      %cst_15 = arith.constant 0.000000e+00 : f32
      %25 = vector.broadcast %cst_15 : f32 to vector<512x128xf32>
      %26 = arith.cmpf oge, %24, %25 : vector<512x128xf32>
      %cst_16 = arith.constant 1.000000e-01 : f32
      %27 = vector.broadcast %cst_16 : f32 to vector<512x128xf32>
      %28 = arith.mulf %27, %24 : vector<512x128xf32>
      %29 = arith.select %26, %24, %28 : vector<512x128xi1>, vector<512x128xf32>
      %c0_17 = arith.constant 0 : index
      %c0_18 = arith.constant 0 : index
      %30 = vector.load %arg6[%c0_17, %c0_18] : memref<512x128xf32, #tpu.memory_space<vmem>>, vector<512x128xf32>
      tpu.vector_store %arg6[%c0_17, %c0_18], %29 {strides = array<i32>} : memref<512x128xf32, #tpu.memory_space<vmem>>, vector<512x128xf32>,
    } else {
    }
    return
  }
  func.func @transform_0(%arg0: i32, %arg1: i32) -> (i32, i32) {
    %c0_i32 = arith.constant 0 : i32
    %c0_i32_0 = arith.constant 0 : i32
    return %arg1, %c0_i32 : i32, i32
  }
  func.func @transform_1(%arg0: i32, %arg1: i32) -> (i32, i32) {
    %c0_i32 = arith.constant 0 : i32
    %c0_i32_0 = arith.constant 0 : i32
    %c0_i32_1 = arith.constant 0 : i32
    return %c0_i32, %c0_i32_0 : i32, i32
  }
  func.func @transform_2(%arg0: i32, %arg1: i32) -> (i32, i32) {
    %c0_i32 = arith.constant 0 : i32
    %c0_i32_0 = arith.constant 0 : i32
    %c0_i32_1 = arith.constant 0 : i32
    return %c0_i32, %c0_i32_0 : i32, i32
  }
  func.func @transform_3(%arg0: i32, %arg1: i32) -> (i32, i32) {
    %c0_i32 = arith.constant 0 : i32
    %c0_i32_0 = arith.constant 0 : i32
    %c0_i32_1 = arith.constant 0 : i32
    return %c0_i32, %c0_i32_0 : i32, i32
  }
  func.func @transform_4(%arg0: i32, %arg1: i32) -> (i32, i32) {
    %0 = arith.muli %arg1, %arg0 : i32
    %c0_i32 = arith.constant 0 : i32
    %c0_i32_0 = arith.constant 0 : i32
    return %0, %c0_i32 : i32, i32
  }
}

</mosaic_0001>

<llo_original>
// kernel: cnn_block_forward.1
$region0: #{cnn_block_forward.1}
  #allocation0 [shape = 'u32[]', space=smem, size = 0x4, offset = 0x4, fixed_abs, tag = 'smem constant byte address 0x4 - core index']
  #allocation1 [shape = 'u32[144,128]{1,0:T(1,128)}', space=vmem, size = 0x12000, scoped, tag = 'internal scratch']
  #allocation2 [shape = 'f32[1,128]{1,0:T(1,128)}', space=vmem, size = 0x200, scoped, tag = 'scratch operand']
  #allocation3 [shape = 'f32[1,128]{1,0:T(1,128)}', space=vmem, size = 0x200, scoped, tag = 'scratch operand']
  #allocation4 [shape = 'f32[1,128]{1,0:T(1,128)}', space=vmem, size = 0x200, scoped, tag = 'scratch operand']
  #allocation5 [shape = 'f32[1,128]{1,0:T(1,128)}', space=vmem, size = 0x200, scoped, tag = 'scratch operand']
  %s0 = inlined_call_operand.vmem [shape: bf16[512,128], index: 0, kind: input, shape index: {}]
  %s1 = inlined_call_operand.vmem [shape: bf16[128,128], index: 1, kind: input, shape index: {}]
  %s2 = inlined_call_operand.vmem [shape: f32[1,128], index: 2, kind: input, shape index: {}]
  %s3 = inlined_call_operand.vmem [shape: f32[1,128], index: 3, kind: input, shape index: {}]
  %s4 = inlined_call_operand.vmem [shape: f32[512,128], index: 4, kind: output, shape index: {}]
  %s5 = sld [smem:[#allocation0]]
  $region65: #{cnn_block_forward.1} parent=0
    _
  %s7 = ssub.s32 1, %s5
  %s8 = scalar_select 0, %s7, %s5
  loop: start=0, step=1, limit=4
  $region2: #{cnn_block_forward.1} parent=0 // loop_pre_header
    _
  $region3: #{cnn_block_forward.1} parent=0 // loop_header
    %s10 = sphi 0, %s14
    %p11 = scmp.ge.s32.totalorder %s10, 4
    %s17 = sphi 0, %s29
    %s18 = sphi 0, %s25
    %s19 = sphi 0, %s17
    %s20 = sphi 0, %s18
    %s21 = sphi 0, %s19
    %s22 = sphi 0, %s20
    %s32 = sphi 0, %s34
    %s35 = sphi 0, %s32
    %s36 = sphi 0, %s35
    %s52 = sphi 0, %s36
    %s56 = sphi 0, %s56
    %s58 = sphi 0, %s56
    %s59 = sphi 0, %s58
    %s73 = sphi 0, %s59
    %s77 = sphi 0, %s77
    %s79 = sphi 0, %s77
    %s80 = sphi 0, %s79
    %s94 = sphi 0, %s80
    %s98 = sphi 0, %s98
    %s100 = sphi 0, %s98
    %s101 = sphi 0, %s100
    %s115 = sphi 0, %s101
    %s123 = sphi 0, %s125
    %s126 = sphi 0, %s123
    %s127 = sphi 0, %s126
    %s143 = sphi 0, %s127
  $region4: #{cnn_block_forward.1} parent=0 // loop_header_branch
    %13 = sbr.rel (%p11) target = $region8
  $region5: #{cnn_block_forward.1} parent=0 // loop_body
    %s15 = ssub.s32 %s10, 1
    %s16 = ssub.s32 %s10, 2
    %s23 = sadd.s32 1, %s18
    %p24 = scmp.ge.s32.totalorder %s23, 1
    %s25 = scalar_select %p24, 0, %s23
    %s26 = sadd.s32 1, %s17
    %s27 = scalar_select %p24, %s26, %s17
    %p28 = scmp.ge.s32.totalorder %s27, 2
    %s29 = scalar_select %p28, 0, %s27
    %s30 = ssub.s32 %s18, %s25
    %p31 = scmp.eq.s32.totalorder %s30, 0
    %s33 = sadd.s32 %s32, 1
    %s34 = scalar_select %p31, %s32, %s33
    %p37 = pneg %p31
    %p38 = scmp.eq.s32.totalorder %s10, 1
    %p39 = por %p37, %p38
    %p40 = scmp.ne.s32.totalorder %s32, %s35
    %p41 = scmp.eq.s32.totalorder %s10, 0
    %p42 = por %p40, %p41
    %p43 = scmp.ne.s32.totalorder %s32, %s35
    %p44 = scmp.eq.s32.totalorder %s15, 1
    %p45 = por %p43, %p44
    %p46 = scmp.ne.s32.totalorder %s35, %s36
    %p47 = scmp.eq.s32.totalorder %s15, 0
    %p48 = por %p46, %p47
    %p49 = scmp.ne.s32.totalorder %s35, %s36
    %p50 = scmp.eq.s32.totalorder %s16, 1
    %p51 = por %p49, %p50
    %p53 = scmp.ne.s32.totalorder %s36, %s52
    %p54 = scmp.eq.s32.totalorder %s16, 0
    %p55 = por %p53, %p54
    %s57 = sadd.s32 %s56, 1
    %p60 = scmp.eq.s32.totalorder %s10, 1
    %p61 = scmp.ne.s32.totalorder %s56, %s58
    %p62 = scmp.eq.s32.totalorder %s10, 0
    %p63 = por %p61, %p62
    %p64 = scmp.ne.s32.totalorder %s56, %s58
    %p65 = scmp.eq.s32.totalorder %s15, 1
    %p66 = por %p64, %p65
    %p67 = scmp.ne.s32.totalorder %s58, %s59
    %p68 = scmp.eq.s32.totalorder %s15, 0
    %p69 = por %p67, %p68
    %p70 = scmp.ne.s32.totalorder %s58, %s59
    %p71 = scmp.eq.s32.totalorder %s16, 1
    %p72 = por %p70, %p71
    %p74 = scmp.ne.s32.totalorder %s59, %s73
    %p75 = scmp.eq.s32.totalorder %s16, 0
    %p76 = por %p74, %p75
    %s78 = sadd.s32 %s77, 1
    %p81 = scmp.eq.s32.totalorder %s10, 1
    %p82 = scmp.ne.s32.totalorder %s77, %s79
    %p83 = scmp.eq.s32.totalorder %s10, 0
    %p84 = por %p82, %p83
    %p85 = scmp.ne.s32.totalorder %s77, %s79
    %p86 = scmp.eq.s32.totalorder %s15, 1
    %p87 = por %p85, %p86
    %p88 = scmp.ne.s32.totalorder %s79, %s80
    %p89 = scmp.eq.s32.totalorder %s15, 0
    %p90 = por %p88, %p89
    %p91 = scmp.ne.s32.totalorder %s79, %s80
    %p92 = scmp.eq.s32.totalorder %s16, 1
    %p93 = por %p91, %p92
    %p95 = scmp.ne.s32.totalorder %s80, %s94
    %p96 = scmp.eq.s32.totalorder %s16, 0
    %p97 = por %p95, %p96
    %s99 = sadd.s32 %s98, 1
    %p102 = scmp.eq.s32.totalorder %s10, 1
    %p103 = scmp.ne.s32.totalorder %s98, %s100
    %p104 = scmp.eq.s32.totalorder %s10, 0
    %p105 = por %p103, %p104
    %p106 = scmp.ne.s32.totalorder %s98, %s100
    %p107 = scmp.eq.s32.totalorder %s15, 1
    %p108 = por %p106, %p107
    %p109 = scmp.ne.s32.totalorder %s100, %s101
    %p110 = scmp.eq.s32.totalorder %s15, 0
    %p111 = por %p109, %p110
    %p112 = scmp.ne.s32.totalorder %s100, %s101
    %p113 = scmp.eq.s32.totalorder %s16, 1
    %p114 = por %p112, %p113
    %p116 = scmp.ne.s32.totalorder %s101, %s115
    %p117 = scmp.eq.s32.totalorder %s16, 0
    %p118 = por %p116, %p117
    %s119 = smul.u32 %s18, %s17
    %s120 = smul.u32 %s25, %s29
    %s121 = ssub.s32 %s119, %s120
    %p122 = scmp.eq.s32.totalorder %s121, 0
    %s124 = sadd.s32 %s123, 1
    %s125 = scalar_select %p122, %s123, %s124
    %p128 = pneg %p122
    %p129 = scmp.eq.s32.totalorder %s10, 1
    %p130 = por %p128, %p129
    %p131 = scmp.ne.s32.totalorder %s123, %s126
    %p132 = scmp.eq.s32.totalorder %s10, 0
    %p133 = por %p131, %p132
    %p134 = scmp.ne.s32.totalorder %s123, %s126
    %p135 = scmp.eq.s32.totalorder %s15, 1
    %p136 = por %p134, %p135
    %p137 = scmp.ne.s32.totalorder %s126, %s127
    %p138 = scmp.eq.s32.totalorder %s15, 0
    %p139 = por %p137, %p138
    %p140 = scmp.ne.s32.totalorder %s126, %s127
    %p141 = scmp.eq.s32.totalorder %s16, 1
    %p142 = por %p140, %p141
    %p144 = scmp.ne.s32.totalorder %s127, %s143
    %p145 = scmp.eq.s32.totalorder %s16, 0
    %p146 = por %p144, %p145
    %p147 = scmp.le.s32.totalorder 1, %s10
    %p148 = scmp.lt.s32.totalorder %s10, 3
    %p149 = pnand %p147, %p148
    %p150 = pneg %p149
    // Predicated region
    $region9: #{cnn_block_forward.1} parent=5 // pred_check
      _
    $region10: #{cnn_block_forward.1} parent=5 // pred_check_branch
      %152 = sbr.rel (%p149) target = $region12
    $region11: #{cnn_block_forward.1} parent=5 // pred_region
      %s153 = ssub.s32 %s10, 1
      // Predicated region
      $region13: #{cnn_block_forward.1} parent=11 // pred_check
        %p154 = pneg %p48
      $region14: #{cnn_block_forward.1} parent=11 // pred_check_branch
        %156 = sbr.rel (%p154) target = $region16
      $region15: #{cnn_block_forward.1} parent=11 // pred_region
        %s157 = smul.u32 64, %s20
        %p158 = scmp.lt.s32.totalorder %s157, 63
        %s159 = scalar_select %p158, %s157, 63
        %s160 = smul.addr %s159, 4
        %s161 = scalar_lea.vmem %s0, %s160
        %s162 = smul.u32 64, %s20
      $region16: #{cnn_block_forward.1} parent=11 // pred_fallthru
        _
      // Predicated region
      $region17: #{cnn_block_forward.1} parent=11 // pred_check
        %p163 = pneg %p69
      $region18: #{cnn_block_forward.1} parent=11 // pred_check_branch
        %165 = sbr.rel (%p163) target = $region20
      $region19: #{cnn_block_forward.1} parent=11 // pred_region
        _
      $region20: #{cnn_block_forward.1} parent=11 // pred_fallthru
        _
      // Predicated region
      $region21: #{cnn_block_forward.1} parent=11 // pred_check
        %p166 = pneg %p90
      $region22: #{cnn_block_forward.1} parent=11 // pred_check_branch
        %168 = sbr.rel (%p166) target = $region24
      $region23: #{cnn_block_forward.1} parent=11 // pred_region
        _
      $region24: #{cnn_block_forward.1} parent=11 // pred_fallthru
        _
      // Predicated region
      $region25: #{cnn_block_forward.1} parent=11 // pred_check
        %p169 = pneg %p111
      $region26: #{cnn_block_forward.1} parent=11 // pred_check_branch
        %171 = sbr.rel (%p169) target = $region28
      $region27: #{cnn_block_forward.1} parent=11 // pred_region
        _
      $region28: #{cnn_block_forward.1} parent=11 // pred_fallthru
        _
    $region12: #{cnn_block_forward.1} parent=5 // pred_fallthru
      _
    %p172 = scmp.lt.s32.totalorder %s10, 2
    // Predicated region
    $region29: #{cnn_block_forward.1} parent=5 // pred_check
      %p173 = pneg %p172
    $region30: #{cnn_block_forward.1} parent=5 // pred_check_branch
      %175 = sbr.rel (%p173) target = $region32
    $region31: #{cnn_block_forward.1} parent=5 // pred_region
      _
    $region32: #{cnn_block_forward.1} parent=5 // pred_fallthru
      _
    %p176 = scmp.le.s32.totalorder 1, %s10
    %p177 = scmp.lt.s32.totalorder %s10, 3
    %p178 = pnand %p176, %p177
    %p179 = pneg %p178
    // Predicated region
    $region33: #{cnn_block_forward.1} parent=5 // pred_check
      _
    $region34: #{cnn_block_forward.1} parent=5 // pred_check_branch
      %181 = sbr.rel (%p178) target = $region36
    $region35: #{cnn_block_forward.1} parent=5 // pred_region
      %s182 = ssub.s32 %s10, 1
      %s183 = smul.u32 64, %s20
      %p184 = scmp.lt.s32.totalorder %s183, 63
      %s185 = scalar_select %p184, %s183, 63
      %s186 = smul.addr %s185, 4
      %s187 = scalar_lea.vmem %s0, %s186
      %p188 = pneg %p48
      %p189 = pneg %p45
      %p190 = pneg %p69
      %p191 = pneg %p66
      %p192 = pneg %p90
      %p193 = pneg %p87
      %p194 = pneg %p111
      %p195 = pneg %p108
      %p196 = pneg %p139
      %p197 = pneg %p136
      %s198 = smul.u32 %s20, %s19
      %s199 = smul.u32 64, %s198
      %p200 = scmp.lt.s32.totalorder %s199, 63
      %s201 = scalar_select %p200, %s199, 63
      %s202 = smul.addr %s201, 8
      %s203 = scalar_lea.vmem %s4, %s202
      %s204 = smul.u32 64, %s20
      %p205 = scmp.lt.s32.totalorder %s204, 63
      %s206 = scalar_select %p205, %s204, 63
      %s207 = smul.addr %s206, 4
      %s208 = scalar_lea.vmem %s0, %s207
      %s209 = smul.u32 64, %s20
      %s210 = smul.u32 %s20, %s19
      %s211 = smul.u32 64, %s210
      %p212 = scmp.lt.s32.totalorder %s211, 63
      %s213 = scalar_select %p212, %s211, 63
      %s214 = smul.addr %s213, 8
      %s215 = scalar_lea.vmem %s4, %s214
      %s216 = smul.u32 %s20, %s19
      %s217 = smul.u32 64, %s216
      %v219 = vld [vmem:[%s208] sm:$0xf]
      %v220 = vld [vmem:[%s208 + $0x4] sm:$0xf]
      %v221 = vld [vmem:[%s208 + $0x8] sm:$0xf]
      %v222 = vld [vmem:[%s208 + $0xc] sm:$0xf]
      %v223 = vld [vmem:[%s208 + $0x10] sm:$0xf]
      %v224 = vld [vmem:[%s208 + $0x14] sm:$0xf]
      %v225 = vld [vmem:[%s208 + $0x18] sm:$0xf]
      %v226 = vld [vmem:[%s208 + $0x1c] sm:$0xf]
      %v227 = vld [vmem:[%s208 + $0x20] sm:$0xf]
      %v228 = vld [vmem:[%s208 + $0x24] sm:$0xf]
      %v229 = vld [vmem:[%s208 + $0x28] sm:$0xf]
      %v230 = vld [vmem:[%s208 + $0x2c] sm:$0xf]
      %v231 = vld [vmem:[%s208 + $0x30] sm:$0xf]
      %v232 = vld [vmem:[%s208 + $0x34] sm:$0xf]
      %v233 = vld [vmem:[%s208 + $0x38] sm:$0xf]
      %v234 = vld [vmem:[%s208 + $0x3c] sm:$0xf]
      %v235 = vld [vmem:[%s208 + $0x40] sm:$0xf]
      %v236 = vld [vmem:[%s208 + $0x44] sm:$0xf]
      %v237 = vld [vmem:[%s208 + $0x48] sm:$0xf]
      %v238 = vld [vmem:[%s208 + $0x4c] sm:$0xf]
      %v239 = vld [vmem:[%s208 + $0x50] sm:$0xf]
      %v240 = vld [vmem:[%s208 + $0x54] sm:$0xf]
      %v241 = vld [vmem:[%s208 + $0x58] sm:$0xf]
      %v242 = vld [vmem:[%s208 + $0x5c] sm:$0xf]
      %v243 = vld [vmem:[%s208 + $0x60] sm:$0xf]
      %v244 = vld [vmem:[%s208 + $0x64] sm:$0xf]
      %v245 = vld [vmem:[%s208 + $0x68] sm:$0xf]
      %v246 = vld [vmem:[%s208 + $0x6c] sm:$0xf]
      %v247 = vld [vmem:[%s208 + $0x70] sm:$0xf]
      %v248 = vld [vmem:[%s208 + $0x74] sm:$0xf]
      %v249 = vld [vmem:[%s208 + $0x78] sm:$0xf]
      %v250 = vld [vmem:[%s208 + $0x7c] sm:$0xf]
      %v251 = vld [vmem:[%s208 + $0x80] sm:$0xf]
      %v252 = vld [vmem:[%s208 + $0x84] sm:$0xf]
      %v253 = vld [vmem:[%s208 + $0x88] sm:$0xf]
      %v254 = vld [vmem:[%s208 + $0x8c] sm:$0xf]
      %v255 = vld [vmem:[%s208 + $0x90] sm:$0xf]
      %v256 = vld [vmem:[%s208 + $0x94] sm:$0xf]
      %v257 = vld [vmem:[%s208 + $0x98] sm:$0xf]
      %v258 = vld [vmem:[%s208 + $0x9c] sm:$0xf]
      %v259 = vld [vmem:[%s208 + $0xa0] sm:$0xf]
      %v260 = vld [vmem:[%s208 + $0xa4] sm:$0xf]
      %v261 = vld [vmem:[%s208 + $0xa8] sm:$0xf]
      %v262 = vld [vmem:[%s208 + $0xac] sm:$0xf]
      %v263 = vld [vmem:[%s208 + $0xb0] sm:$0xf]
      %v264 = vld [vmem:[%s208 + $0xb4] sm:$0xf]
      %v265 = vld [vmem:[%s208 + $0xb8] sm:$0xf]
      %v266 = vld [vmem:[%s208 + $0xbc] sm:$0xf]
      %v267 = vld [vmem:[%s208 + $0xc0] sm:$0xf]
      %v268 = vld [vmem:[%s208 + $0xc4] sm:$0xf]
      %v269 = vld [vmem:[%s208 + $0xc8] sm:$0xf]
      %v270 = vld [vmem:[%s208 + $0xcc] sm:$0xf]
      %v271 = vld [vmem:[%s208 + $0xd0] sm:$0xf]
      %v272 = vld [vmem:[%s208 + $0xd4] sm:$0xf]
      %v273 = vld [vmem:[%s208 + $0xd8] sm:$0xf]
      %v274 = vld [vmem:[%s208 + $0xdc] sm:$0xf]
      %v275 = vld [vmem:[%s208 + $0xe0] sm:$0xf]
      %v276 = vld [vmem:[%s208 + $0xe4] sm:$0xf]
      %v277 = vld [vmem:[%s208 + $0xe8] sm:$0xf]
      %v278 = vld [vmem:[%s208 + $0xec] sm:$0xf]
      %v279 = vld [vmem:[%s208 + $0xf0] sm:$0xf]
      %v280 = vld [vmem:[%s208 + $0xf4] sm:$0xf]
      %v281 = vld [vmem:[%s208 + $0xf8] sm:$0xf]
      %v282 = vld [vmem:[%s208 + $0xfc] sm:$0xf]
      %v283 = vld [vmem:[%s1] sm:$0xf]
      %v284 = vld [vmem:[%s1 + $0x4] sm:$0xf]
      %v285 = vld [vmem:[%s1 + $0x8] sm:$0xf]
      %v286 = vld [vmem:[%s1 + $0xc] sm:$0xf]
      %v287 = vld [vmem:[%s1 + $0x10] sm:$0xf]
      %v288 = vld [vmem:[%s1 + $0x14] sm:$0xf]
      %v289 = vld [vmem:[%s1 + $0x18] sm:$0xf]
      %v290 = vld [vmem:[%s1 + $0x1c] sm:$0xf]
      %v291 = vld [vmem:[%s1 + $0x20] sm:$0xf]
      %v292 = vld [vmem:[%s1 + $0x24] sm:$0xf]
      %v293 = vld [vmem:[%s1 + $0x28] sm:$0xf]
      %v294 = vld [vmem:[%s1 + $0x2c] sm:$0xf]
      %v295 = vld [vmem:[%s1 + $0x30] sm:$0xf]
      %v296 = vld [vmem:[%s1 + $0x34] sm:$0xf]
      %v297 = vld [vmem:[%s1 + $0x38] sm:$0xf]
      %v298 = vld [vmem:[%s1 + $0x3c] sm:$0xf]
      %v363 = vunpack.c.l.b16 %v219
      %v364 = vunpack.c.l.b16 %v220
      %v365 = vunpack.c.l.b16 %v221
      %v366 = vunpack.c.l.b16 %v222
      %v367 = vunpack.c.l.b16 %v223
      %v368 = vunpack.c.l.b16 %v224
      %v369 = vunpack.c.l.b16 %v225
      %v370 = vunpack.c.l.b16 %v226
      %v371 = vunpack.c.l.b16 %v227
      %v372 = vunpack.c.l.b16 %v228
      %v373 = vunpack.c.l.b16 %v229
      %v374 = vunpack.c.l.b16 %v230
      %v375 = vunpack.c.l.b16 %v231
      %v376 = vunpack.c.l.b16 %v232
      %v377 = vunpack.c.l.b16 %v233
      %v378 = vunpack.c.l.b16 %v234
      %v379 = vunpack.c.l.b16 %v235
      %v380 = vunpack.c.l.b16 %v236
      %v381 = vunpack.c.l.b16 %v237
      %v382 = vunpack.c.l.b16 %v238
      %v383 = vunpack.c.l.b16 %v239
      %v384 = vunpack.c.l.b16 %v240
      %v385 = vunpack.c.l.b16 %v241
      %v386 = vunpack.c.l.b16 %v242
      %v387 = vunpack.c.l.b16 %v243
      %v388 = vunpack.c.l.b16 %v244
      %v389 = vunpack.c.l.b16 %v245
      %v390 = vunpack.c.l.b16 %v246
      %v391 = vunpack.c.l.b16 %v247
      %v392 = vunpack.c.l.b16 %v248
      %v393 = vunpack.c.l.b16 %v249
      %v394 = vunpack.c.l.b16 %v250
      %v395 = vunpack.c.l.b16 %v251
      %v396 = vunpack.c.l.b16 %v252
      %v397 = vunpack.c.l.b16 %v253
      %v398 = vunpack.c.l.b16 %v254
      %v399 = vunpack.c.l.b16 %v255
      %v400 = vunpack.c.l.b16 %v256
      %v401 = vunpack.c.l.b16 %v257
      %v402 = vunpack.c.l.b16 %v258
      %v403 = vunpack.c.l.b16 %v259
      %v404 = vunpack.c.l.b16 %v260
      %v405 = vunpack.c.l.b16 %v261
      %v406 = vunpack.c.l.b16 %v262
      %v407 = vunpack.c.l.b16 %v263
      %v408 = vunpack.c.l.b16 %v264
      %v409 = vunpack.c.l.b16 %v265
      %v410 = vunpack.c.l.b16 %v266
      %v411 = vunpack.c.l.b16 %v267
      %v412 = vunpack.c.l.b16 %v268
      %v413 = vunpack.c.l.b16 %v269
      %v414 = vunpack.c.l.b16 %v270
      %v415 = vunpack.c.l.b16 %v271
      %v416 = vunpack.c.l.b16 %v272
      %v417 = vunpack.c.l.b16 %v273
      %v418 = vunpack.c.l.b16 %v274
      %v419 = vunpack.c.l.b16 %v275
      %v420 = vunpack.c.l.b16 %v276
      %v421 = vunpack.c.l.b16 %v277
      %v422 = vunpack.c.l.b16 %v278
      %v423 = vunpack.c.l.b16 %v279
      %v424 = vunpack.c.l.b16 %v280
      %v425 = vunpack.c.l.b16 %v281
      %v426 = vunpack.c.l.b16 %v282
      %v427 = vpack.c.b16 %v364, %v363
      %v428 = vpack.c.b16 %v366, %v365
      %v429 = vpack.c.b16 %v368, %v367
      %v430 = vpack.c.b16 %v370, %v369
      %v431 = vpack.c.b16 %v372, %v371
      %v432 = vpack.c.b16 %v374, %v373
      %v433 = vpack.c.b16 %v376, %v375
      %v434 = vpack.c.b16 %v378, %v377
      %v435 = vpack.c.b16 %v380, %v379
      %v436 = vpack.c.b16 %v382, %v381
      %v437 = vpack.c.b16 %v384, %v383
      %v438 = vpack.c.b16 %v386, %v385
      %v439 = vpack.c.b16 %v388, %v387
      %v440 = vpack.c.b16 %v390, %v389
      %v441 = vpack.c.b16 %v392, %v391
      %v442 = vpack.c.b16 %v394, %v393
      %v443 = vpack.c.b16 %v396, %v395
      %v444 = vpack.c.b16 %v398, %v397
      %v445 = vpack.c.b16 %v400, %v399
      %v446 = vpack.c.b16 %v402, %v401
      %v447 = vpack.c.b16 %v404, %v403
      %v448 = vpack.c.b16 %v406, %v405
      %v449 = vpack.c.b16 %v408, %v407
      %v450 = vpack.c.b16 %v410, %v409
      %v451 = vpack.c.b16 %v412, %v411
      %v452 = vpack.c.b16 %v414, %v413
      %v453 = vpack.c.b16 %v416, %v415
      %v454 = vpack.c.b16 %v418, %v417
      %v455 = vpack.c.b16 %v420, %v419
      %v456 = vpack.c.b16 %v422, %v421
      %v457 = vpack.c.b16 %v424, %v423
      %v458 = vpack.c.b16 %v426, %v425
      %v507 = vunpack.c.l.b16 %v283
      %v508 = vunpack.c.l.b16 %v284
      %v509 = vunpack.c.l.b16 %v285
      %v510 = vunpack.c.l.b16 %v286
      %v511 = vunpack.c.l.b16 %v287
      %v512 = vunpack.c.l.b16 %v288
      %v513 = vunpack.c.l.b16 %v289
      %v514 = vunpack.c.l.b16 %v290
      %v515 = vunpack.c.l.b16 %v291
      %v516 = vunpack.c.l.b16 %v292
      %v517 = vunpack.c.l.b16 %v293
      %v518 = vunpack.c.l.b16 %v294
      %v519 = vunpack.c.l.b16 %v295
      %v520 = vunpack.c.l.b16 %v296
      %v521 = vunpack.c.l.b16 %v297
      %v522 = vunpack.c.l.b16 %v298
      %v523 = vpack.c.b16 %v508, %v507
      %v524 = vpack.c.b16 %v510, %v509
      %v525 = vpack.c.b16 %v512, %v511
      %v526 = vpack.c.b16 %v514, %v513
      %v527 = vpack.c.b16 %v516, %v515
      %v528 = vpack.c.b16 %v518, %v517
      %v529 = vpack.c.b16 %v520, %v519
      %v530 = vpack.c.b16 %v522, %v521
      %539 = vmatprep.subr.bf16.mxu0 0
      %540 = vmatpush1.bf16.msra.mxu0 %v530
      %541 = vmatprep.subr.bf16.mxu0 0
      %542 = vmatpush1.bf16.msra.mxu0 %v529
      %543 = vmatprep.subr.bf16.mxu0 0
      %544 = vmatpush1.bf16.msra.mxu0 %v528
      %545 = vmatprep.subr.bf16.mxu0 0
      %546 = vmatpush1.bf16.msra.mxu0 %v527
      %547 = vmatprep.subr.bf16.mxu0 0
      %548 = vmatpush1.bf16.msra.mxu0 %v526
      %549 = vmatprep.subr.bf16.mxu0 0
      %550 = vmatpush1.bf16.msra.mxu0 %v525
      %551 = vmatprep.subr.bf16.mxu0 0
      %552 = vmatpush1.bf16.msra.mxu0 %v524
      %553 = vmatprep.subr.bf16.mxu0 0
      %554 = vmatpush1.bf16.msra.mxu0 %v523
      %555 = vmatprep.subr.bf16.mxu0 0
      %556 = vmatpush2.bf16.msra.mxu0 0
      %557 = vmatprep.subr.bf16.mxu0 0
      %558 = vmatpush2.bf16.msra.mxu0 0
      %559 = vmatprep.subr.bf16.mxu0 0
      %560 = vmatpush2.bf16.msra.mxu0 0
      %561 = vmatprep.subr.bf16.mxu0 0
      %562 = vmatpush2.bf16.msra.mxu0 0
      %563 = vmatprep.subr.bf16.mxu0 0
      %564 = vmatpush2.bf16.msra.mxu0 0
      %565 = vmatprep.subr.bf16.mxu0 0
      %566 = vmatpush2.bf16.msra.mxu0 0
      %567 = vmatprep.subr.bf16.mxu0 0
      %568 = vmatpush2.bf16.msra.mxu0 0
      %569 = vmatprep.subr.bf16.mxu0 0
      %570 = vmatpush2.bf16.msra.mxu0 0
      %571 = vmatprep.mubr.bf16.mxu0 0
      %572 = vmatmul.mubr.bf16.gmra.mxu0 %v427
      %v573 = vpop.f32.mrf.mxu0
      %v574 = vadd.f32 0.0, %v573
      %v575 = vpop.f32.mrf.mxu0
      %v576 = vpop.f32.mrf.mxu0
      %v577 = vadd.f32 0.0, %v576
      %v578 = vpop.f32.mrf.mxu0
      %579 = vmatprep.mubr.bf16.mxu0 0
      %580 = vmatmul.mubr.bf16.gmra.mxu0 %v428
      %v581 = vpop.f32.mrf.mxu0
      %v582 = vadd.f32 0.0, %v581
      %v583 = vpop.f32.mrf.mxu0
      %v584 = vpop.f32.mrf.mxu0
      %v585 = vadd.f32 0.0, %v584
      %v586 = vpop.f32.mrf.mxu0
      %587 = vmatprep.mubr.bf16.mxu0 0
      %588 = vmatmul.mubr.bf16.gmra.mxu0 %v429
      %v589 = vpop.f32.mrf.mxu0
      %v590 = vadd.f32 0.0, %v589
      %v591 = vpop.f32.mrf.mxu0
      %v592 = vpop.f32.mrf.mxu0
      %v593 = vadd.f32 0.0, %v592
      %v594 = vpop.f32.mrf.mxu0
      %595 = vmatprep.mubr.bf16.mxu0 0
      %596 = vmatmul.mubr.bf16.gmra.mxu0 %v430
      %v597 = vpop.f32.mrf.mxu0
      %v598 = vadd.f32 0.0, %v597
      %v599 = vpop.f32.mrf.mxu0
      %v600 = vpop.f32.mrf.mxu0
      %v601 = vadd.f32 0.0, %v600
      %v602 = vpop.f32.mrf.mxu0
      %603 = vmatprep.mubr.bf16.mxu0 0
      %604 = vmatmul.mubr.bf16.gmra.mxu0 %v431
      %v605 = vpop.f32.mrf.mxu0
      %v606 = vadd.f32 0.0, %v605
      %v607 = vpop.f32.mrf.mxu0
      %v608 = vpop.f32.mrf.mxu0
      %v609 = vadd.f32 0.0, %v608
      %v610 = vpop.f32.mrf.mxu0
      %611 = vmatprep.mubr.bf16.mxu0 0
      %612 = vmatmul.mubr.bf16.gmra.mxu0 %v432
      %v613 = vpop.f32.mrf.mxu0
      %v614 = vadd.f32 0.0, %v613
      %v615 = vpop.f32.mrf.mxu0
      %v616 = vpop.f32.mrf.mxu0
      %v617 = vadd.f32 0.0, %v616
      %v618 = vpop.f32.mrf.mxu0
      %619 = vmatprep.mubr.bf16.mxu0 0
      %620 = vmatmul.mubr.bf16.gmra.mxu0 %v433
      %v621 = vpop.f32.mrf.mxu0
      %v622 = vadd.f32 0.0, %v621
      %v623 = vpop.f32.mrf.mxu0
      %v624 = vpop.f32.mrf.mxu0
      %v625 = vadd.f32 0.0, %v624
      %v626 = vpop.f32.mrf.mxu0
      %627 = vmatprep.mubr.bf16.mxu0 0
      %628 = vmatmul.mubr.bf16.gmra.mxu0 %v434
      %v629 = vpop.f32.mrf.mxu0
      %v630 = vadd.f32 0.0, %v629
      %v631 = vpop.f32.mrf.mxu0
      %v632 = vpop.f32.mrf.mxu0
      %v633 = vadd.f32 0.0, %v632
      %v634 = vpop.f32.mrf.mxu0
      %635 = vmatprep.mubr.bf16.mxu0 0
      %636 = vmatmul.mubr.bf16.gmra.mxu0 %v435
      %v637 = vpop.f32.mrf.mxu0
      %v638 = vadd.f32 0.0, %v637
      %v639 = vpop.f32.mrf.mxu0
      %v640 = vpop.f32.mrf.mxu0
      %v641 = vadd.f32 0.0, %v640
      %v642 = vpop.f32.mrf.mxu0
      %643 = vmatprep.mubr.bf16.mxu0 0
      %644 = vmatmul.mubr.bf16.gmra.mxu0 %v436
      %v645 = vpop.f32.mrf.mxu0
      %v646 = vadd.f32 0.0, %v645
      %v647 = vpop.f32.mrf.mxu0
      %v648 = vpop.f32.mrf.mxu0
      %v649 = vadd.f32 0.0, %v648
      %v650 = vpop.f32.mrf.mxu0
      %651 = vmatprep.mubr.bf16.mxu0 0
      %652 = vmatmul.mubr.bf16.gmra.mxu0 %v437
      %v653 = vpop.f32.mrf.mxu0
      %v654 = vadd.f32 0.0, %v653
      %v655 = vpop.f32.mrf.mxu0
      %v656 = vpop.f32.mrf.mxu0
      %v657 = vadd.f32 0.0, %v656
      %v658 = vpop.f32.mrf.mxu0
      %659 = vmatprep.mubr.bf16.mxu0 0
      %660 = vmatmul.mubr.bf16.gmra.mxu0 %v438
      %v661 = vpop.f32.mrf.mxu0
      %v662 = vadd.f32 0.0, %v661
      %v663 = vpop.f32.mrf.mxu0
      %v664 = vpop.f32.mrf.mxu0
      %v665 = vadd.f32 0.0, %v664
      %v666 = vpop.f32.mrf.mxu0
      %667 = vmatprep.mubr.bf16.mxu0 0
      %668 = vmatmul.mubr.bf16.gmra.mxu0 %v439
      %v669 = vpop.f32.mrf.mxu0
      %v670 = vadd.f32 0.0, %v669
      %v671 = vpop.f32.mrf.mxu0
      %v672 = vpop.f32.mrf.mxu0
      %v673 = vadd.f32 0.0, %v672
      %v674 = vpop.f32.mrf.mxu0
      %675 = vmatprep.mubr.bf16.mxu0 0
      %676 = vmatmul.mubr.bf16.gmra.mxu0 %v440
      %v677 = vpop.f32.mrf.mxu0
      %v678 = vadd.f32 0.0, %v677
      %v679 = vpop.f32.mrf.mxu0
      %v680 = vpop.f32.mrf.mxu0
      %v681 = vadd.f32 0.0, %v680
      %v682 = vpop.f32.mrf.mxu0
      %683 = vmatprep.mubr.bf16.mxu0 0
      %684 = vmatmul.mubr.bf16.gmra.mxu0 %v441
      %v685 = vpop.f32.mrf.mxu0
      %v686 = vadd.f32 0.0, %v685
      %v687 = vpop.f32.mrf.mxu0
      %v688 = vpop.f32.mrf.mxu0
      %v689 = vadd.f32 0.0, %v688
      %v690 = vpop.f32.mrf.mxu0
      %691 = vmatprep.mubr.bf16.mxu0 0
      %692 = vmatmul.mubr.bf16.gmra.mxu0 %v442
      %v693 = vpop.f32.mrf.mxu0
      %v694 = vadd.f32 0.0, %v693
      %v695 = vpop.f32.mrf.mxu0
      %v696 = vpop.f32.mrf.mxu0
      %v697 = vadd.f32 0.0, %v696
      %v698 = vpop.f32.mrf.mxu0
      %699 = vmatprep.mubr.bf16.mxu0 0
      %700 = vmatmul.mubr.bf16.gmra.mxu0 %v443
      %v701 = vpop.f32.mrf.mxu0
      %v702 = vadd.f32 0.0, %v701
      %v703 = vpop.f32.mrf.mxu0
      %v704 = vpop.f32.mrf.mxu0
      %v705 = vadd.f32 0.0, %v704
      %v706 = vpop.f32.mrf.mxu0
      %707 = vmatprep.mubr.bf16.mxu0 0
      %708 = vmatmul.mubr.bf16.gmra.mxu0 %v444
      %v709 = vpop.f32.mrf.mxu0
      %v710 = vadd.f32 0.0, %v709
      %v711 = vpop.f32.mrf.mxu0
      %v712 = vpop.f32.mrf.mxu0
      %v713 = vadd.f32 0.0, %v712
      %v714 = vpop.f32.mrf.mxu0
      %715 = vmatprep.mubr.bf16.mxu0 0
      %716 = vmatmul.mubr.bf16.gmra.mxu0 %v445
      %v717 = vpop.f32.mrf.mxu0
      %v718 = vadd.f32 0.0, %v717
      %v719 = vpop.f32.mrf.mxu0
      %v720 = vpop.f32.mrf.mxu0
      %v721 = vadd.f32 0.0, %v720
      %v722 = vpop.f32.mrf.mxu0
      %723 = vmatprep.mubr.bf16.mxu0 0
      %724 = vmatmul.mubr.bf16.gmra.mxu0 %v446
      %v725 = vpop.f32.mrf.mxu0
      %v726 = vadd.f32 0.0, %v725
      %v727 = vpop.f32.mrf.mxu0
      %v728 = vpop.f32.mrf.mxu0
      %v729 = vadd.f32 0.0, %v728
      %v730 = vpop.f32.mrf.mxu0
      %731 = vmatprep.mubr.bf16.mxu0 0
      %732 = vmatmul.mubr.bf16.gmra.mxu0 %v447
      %v733 = vpop.f32.mrf.mxu0
      %v734 = vadd.f32 0.0, %v733
      %v735 = vpop.f32.mrf.mxu0
      %v736 = vpop.f32.mrf.mxu0
      %v737 = vadd.f32 0.0, %v736
      %v738 = vpop.f32.mrf.mxu0
      %739 = vmatprep.mubr.bf16.mxu0 0
      %740 = vmatmul.mubr.bf16.gmra.mxu0 %v448
      %v741 = vpop.f32.mrf.mxu0
      %v742 = vadd.f32 0.0, %v741
      %v743 = vpop.f32.mrf.mxu0
      %v744 = vpop.f32.mrf.mxu0
      %v745 = vadd.f32 0.0, %v744
      %v746 = vpop.f32.mrf.mxu0
      %747 = vmatprep.mubr.bf16.mxu0 0
      %748 = vmatmul.mubr.bf16.gmra.mxu0 %v449
      %v749 = vpop.f32.mrf.mxu0
      %v750 = vadd.f32 0.0, %v749
      %v751 = vpop.f32.mrf.mxu0
      %v752 = vpop.f32.mrf.mxu0
      %v753 = vadd.f32 0.0, %v752
      %v754 = vpop.f32.mrf.mxu0
      %755 = vmatprep.mubr.bf16.mxu0 0
      %756 = vmatmul.mubr.bf16.gmra.mxu0 %v450
      %v757 = vpop.f32.mrf.mxu0
      %v758 = vadd.f32 0.0, %v757
      %v759 = vpop.f32.mrf.mxu0
      %v760 = vpop.f32.mrf.mxu0
      %v761 = vadd.f32 0.0, %v760
      %v762 = vpop.f32.mrf.mxu0
      %763 = vmatprep.mubr.bf16.mxu0 0
      %764 = vmatmul.mubr.bf16.gmra.mxu0 %v451
      %v765 = vpop.f32.mrf.mxu0
      %v766 = vadd.f32 0.0, %v765
      %v767 = vpop.f32.mrf.mxu0
      %v768 = vpop.f32.mrf.mxu0
      %v769 = vadd.f32 0.0, %v768
      %v770 = vpop.f32.mrf.mxu0
      %771 = vmatprep.mubr.bf16.mxu0 0
      %772 = vmatmul.mubr.bf16.gmra.mxu0 %v452
      %v773 = vpop.f32.mrf.mxu0
      %v774 = vadd.f32 0.0, %v773
      %v775 = vpop.f32.mrf.mxu0
      %v776 = vpop.f32.mrf.mxu0
      %v777 = vadd.f32 0.0, %v776
      %v778 = vpop.f32.mrf.mxu0
      %779 = vmatprep.mubr.bf16.mxu0 0
      %780 = vmatmul.mubr.bf16.gmra.mxu0 %v453
      %v781 = vpop.f32.mrf.mxu0
      %v782 = vadd.f32 0.0, %v781
      %v783 = vpop.f32.mrf.mxu0
      %v784 = vpop.f32.mrf.mxu0
      %v785 = vadd.f32 0.0, %v784
      %v786 = vpop.f32.mrf.mxu0
      %787 = vmatprep.mubr.bf16.mxu0 0
      %788 = vmatmul.mubr.bf16.gmra.mxu0 %v454
      %v789 = vpop.f32.mrf.mxu0
      %v790 = vadd.f32 0.0, %v789
      %v791 = vpop.f32.mrf.mxu0
      %v792 = vpop.f32.mrf.mxu0
      %v793 = vadd.f32 0.0, %v792
      %v794 = vpop.f32.mrf.mxu0
      %795 = vmatprep.mubr.bf16.mxu0 0
      %796 = vmatmul.mubr.bf16.gmra.mxu0 %v455
      %v797 = vpop.f32.mrf.mxu0
      %v798 = vadd.f32 0.0, %v797
      %v799 = vpop.f32.mrf.mxu0
      %v800 = vpop.f32.mrf.mxu0
      %v801 = vadd.f32 0.0, %v800
      %v802 = vpop.f32.mrf.mxu0
      %803 = vmatprep.mubr.bf16.mxu0 0
      %804 = vmatmul.mubr.bf16.gmra.mxu0 %v456
      %v805 = vpop.f32.mrf.mxu0
      %v806 = vadd.f32 0.0, %v805
      %v807 = vpop.f32.mrf.mxu0
      %v808 = vpop.f32.mrf.mxu0
      %v809 = vadd.f32 0.0, %v808
      %v810 = vpop.f32.mrf.mxu0
      %811 = vmatprep.mubr.bf16.mxu0 0
      %812 = vmatmul.mubr.bf16.gmra.mxu0 %v457
      %v813 = vpop.f32.mrf.mxu0
      %v814 = vadd.f32 0.0, %v813
      %v815 = vpop.f32.mrf.mxu0
      %v816 = vpop.f32.mrf.mxu0
      %v817 = vadd.f32 0.0, %v816
      %v818 = vpop.f32.mrf.mxu0
      %819 = vmatprep.mubr.bf16.mxu0 0
      %820 = vmatmul.mubr.bf16.gmra.mxu0 %v458
      %v821 = vpop.f32.mrf.mxu0
      %v822 = vadd.f32 0.0, %v821
      %v823 = vpop.f32.mrf.mxu0
      %v824 = vpop.f32.mrf.mxu0
      %v825 = vadd.f32 0.0, %v824
      %v826 = vpop.f32.mrf.mxu0
      %827 = vdwg.mxu0
      %p828 = scmp.eq.s32.totalorder %s19, 0
      %p829 = scmp.eq.s32.totalorder %s20, 0
      %p830 = pnand %p828, %p829
      %p831 = pneg %p830
      // Predicated region
      $region37: #{cnn_block_forward.1} parent=35 // pred_check
        _
      $region38: #{cnn_block_forward.1} parent=35 // pred_check_branch
        %833 = sbr.rel (%p830) target = $region40
      $region39: #{cnn_block_forward.1} parent=35 // pred_region
        %834 = vst [vmem:[#allocation2] sm:$0x1] 0.0
        %835 = vst [vmem:[#allocation3] sm:$0x1] 0.0
      $region40: #{cnn_block_forward.1} parent=35 // pred_fallthru
        _
      // Predicated region
      $region41: #{cnn_block_forward.1} parent=35 // pred_check
        %p836 = pneg %p828
      $region42: #{cnn_block_forward.1} parent=35 // pred_check_branch
        %838 = sbr.rel (%p836) target = $region44
      $region43: #{cnn_block_forward.1} parent=35 // pred_region
        %v839 = vld [vmem:[#allocation2] sm:$0x1]
        %v840 = vadd.f32 %v574, %v577
        %v841 = vadd.f32 %v840, %v582
        %v842 = vadd.f32 %v841, %v585
        %v843 = vadd.f32 %v842, %v590
        %v844 = vadd.f32 %v843, %v593
        %v845 = vadd.f32 %v844, %v598
        %v846 = vadd.f32 %v845, %v601
        %v847 = vadd.f32 %v846, %v606
        %v848 = vadd.f32 %v847, %v609
        %v849 = vadd.f32 %v848, %v614
        %v850 = vadd.f32 %v849, %v617
        %v851 = vadd.f32 %v850, %v622
        %v852 = vadd.f32 %v851, %v625
        %v853 = vadd.f32 %v852, %v630
        %v854 = vadd.f32 %v853, %v633
        %v855 = vadd.f32 %v854, %v638
        %v856 = vadd.f32 %v855, %v641
        %v857 = vadd.f32 %v856, %v646
        %v858 = vadd.f32 %v857, %v649
        %v859 = vadd.f32 %v858, %v654
        %v860 = vadd.f32 %v859, %v657
        %v861 = vadd.f32 %v860, %v662
        %v862 = vadd.f32 %v861, %v665
        %v863 = vadd.f32 %v862, %v670
        %v864 = vadd.f32 %v863, %v673
        %v865 = vadd.f32 %v864, %v678
        %v866 = vadd.f32 %v865, %v681
        %v867 = vadd.f32 %v866, %v686
        %v868 = vadd.f32 %v867, %v689
        %v869 = vadd.f32 %v868, %v694
        %v870 = vadd.f32 %v869, %v697
        %v871 = vadd.f32 %v870, %v702
        %v872 = vadd.f32 %v871, %v705
        %v873 = vadd.f32 %v872, %v710
        %v874 = vadd.f32 %v873, %v713
        %v875 = vadd.f32 %v874, %v718
        %v876 = vadd.f32 %v875, %v721
        %v877 = vadd.f32 %v876, %v726
        %v878 = vadd.f32 %v877, %v729
        %v879 = vadd.f32 %v878, %v734
        %v880 = vadd.f32 %v879, %v737
        %v881 = vadd.f32 %v880, %v742
        %v882 = vadd.f32 %v881, %v745
        %v883 = vadd.f32 %v882, %v750
        %v884 = vadd.f32 %v883, %v753
        %v885 = vadd.f32 %v884, %v758
        %v886 = vadd.f32 %v885, %v761
        %v887 = vadd.f32 %v886, %v766
        %v888 = vadd.f32 %v887, %v769
        %v889 = vadd.f32 %v888, %v774
        %v890 = vadd.f32 %v889, %v777
        %v891 = vadd.f32 %v890, %v782
        %v892 = vadd.f32 %v891, %v785
        %v893 = vadd.f32 %v892, %v790
        %v894 = vadd.f32 %v893, %v793
        %v895 = vadd.f32 %v894, %v798
        %v896 = vadd.f32 %v895, %v801
        %v897 = vadd.f32 %v896, %v806
        %v898 = vadd.f32 %v897, %v809
        %v899 = vadd.f32 %v898, %v814
        %v900 = vadd.f32 %v899, %v817
        %v901 = vadd.f32 %v900, %v822
        %v902 = vadd.f32 %v901, %v825
        %v903 = vrot.slane %v902, 4
        %v904 = vadd.f32 %v902, %v903
        %v905 = vrot.slane %v904, 2
        %v906 = vadd.f32 %v904, %v905
        %v907 = vrot.slane %v906, 1
        %v908 = vadd.f32 %v906, %v907
        %v909 = vadd.f32 %v839, %v908
        %910 = vst [vmem:[#allocation2] sm:$0x1] %v909
        %v911 = vld [vmem:[#allocation3] sm:$0x1]
        %v912 = vmul.f32 %v574, %v574
        %v913 = vmul.f32 %v577, %v577
        %v914 = vmul.f32 %v582, %v582
        %v915 = vmul.f32 %v585, %v585
        %v916 = vmul.f32 %v590, %v590
        %v917 = vmul.f32 %v593, %v593
        %v918 = vmul.f32 %v598, %v598
        %v919 = vmul.f32 %v601, %v601
        %v920 = vmul.f32 %v606, %v606
        %v921 = vmul.f32 %v609, %v609
        %v922 = vmul.f32 %v614, %v614
        %v923 = vmul.f32 %v617, %v617
        %v924 = vmul.f32 %v622, %v622
        %v925 = vmul.f32 %v625, %v625
        %v926 = vmul.f32 %v630, %v630
        %v927 = vmul.f32 %v633, %v633
        %v928 = vmul.f32 %v638, %v638
        %v929 = vmul.f32 %v641, %v641
        %v930 = vmul.f32 %v646, %v646
        %v931 = vmul.f32 %v649, %v649
        %v932 = vmul.f32 %v654, %v654
        %v933 = vmul.f32 %v657, %v657
        %v934 = vmul.f32 %v662, %v662
        %v935 = vmul.f32 %v665, %v665
        %v936 = vmul.f32 %v670, %v670
        %v937 = vmul.f32 %v673, %v673
        %v938 = vmul.f32 %v678, %v678
        %v939 = vmul.f32 %v681, %v681
        %v940 = vmul.f32 %v686, %v686
        %v941 = vmul.f32 %v689, %v689
        %v942 = vmul.f32 %v694, %v694
        %v943 = vmul.f32 %v697, %v697
        %v944 = vmul.f32 %v702, %v702
        %v945 = vmul.f32 %v705, %v705
        %v946 = vmul.f32 %v710, %v710
        %v947 = vmul.f32 %v713, %v713
        %v948 = vmul.f32 %v718, %v718
        %v949 = vmul.f32 %v721, %v721
        %v950 = vmul.f32 %v726, %v726
        %v951 = vmul.f32 %v729, %v729
        %v952 = vmul.f32 %v734, %v734
        %v953 = vmul.f32 %v737, %v737
        %v954 = vmul.f32 %v742, %v742
        %v955 = vmul.f32 %v745, %v745
        %v956 = vmul.f32 %v750, %v750
        %v957 = vmul.f32 %v753, %v753
        %v958 = vmul.f32 %v758, %v758
        %v959 = vmul.f32 %v761, %v761
        %v960 = vmul.f32 %v766, %v766
        %v961 = vmul.f32 %v769, %v769
        %v962 = vmul.f32 %v774, %v774
        %v963 = vmul.f32 %v777, %v777
        %v964 = vmul.f32 %v782, %v782
        %v965 = vmul.f32 %v785, %v785
        %v966 = vmul.f32 %v790, %v790
        %v967 = vmul.f32 %v793, %v793
        %v968 = vmul.f32 %v798, %v798
        %v969 = vmul.f32 %v801, %v801
        %v970 = vmul.f32 %v806, %v806
        %v971 = vmul.f32 %v809, %v809
        %v972 = vmul.f32 %v814, %v814
        %v973 = vmul.f32 %v817, %v817
        %v974 = vmul.f32 %v822, %v822
        %v975 = vmul.f32 %v825, %v825
        %v976 = vadd.f32 %v912, %v913
        %v977 = vadd.f32 %v976, %v914
        %v978 = vadd.f32 %v977, %v915
        %v979 = vadd.f32 %v978, %v916
        %v980 = vadd.f32 %v979, %v917
        %v981 = vadd.f32 %v980, %v918
        %v982 = vadd.f32 %v981, %v919
        %v983 = vadd.f32 %v982, %v920
        %v984 = vadd.f32 %v983, %v921
        %v985 = vadd.f32 %v984, %v922
        %v986 = vadd.f32 %v985, %v923
        %v987 = vadd.f32 %v986, %v924
        %v988 = vadd.f32 %v987, %v925
        %v989 = vadd.f32 %v988, %v926
        %v990 = vadd.f32 %v989, %v927
        %v991 = vadd.f32 %v990, %v928
        %v992 = vadd.f32 %v991, %v929
        %v993 = vadd.f32 %v992, %v930
        %v994 = vadd.f32 %v993, %v931
        %v995 = vadd.f32 %v994, %v932
        %v996 = vadd.f32 %v995, %v933
        %v997 = vadd.f32 %v996, %v934
        %v998 = vadd.f32 %v997, %v935
        %v999 = vadd.f32 %v998, %v936
        %v1000 = vadd.f32 %v999, %v937
        %v1001 = vadd.f32 %v1000, %v938
        %v1002 = vadd.f32 %v1001, %v939
        %v1003 = vadd.f32 %v1002, %v940
        %v1004 = vadd.f32 %v1003, %v941
        %v1005 = vadd.f32 %v1004, %v942
        %v1006 = vadd.f32 %v1005, %v943
        %v1007 = vadd.f32 %v1006, %v944
        %v1008 = vadd.f32 %v1007, %v945
        %v1009 = vadd.f32 %v1008, %v946
        %v1010 = vadd.f32 %v1009, %v947
        %v1011 = vadd.f32 %v1010, %v948
        %v1012 = vadd.f32 %v1011, %v949
        %v1013 = vadd.f32 %v1012, %v950
        %v1014 = vadd.f32 %v1013, %v951
        %v1015 = vadd.f32 %v1014, %v952
        %v1016 = vadd.f32 %v1015, %v953
        %v1017 = vadd.f32 %v1016, %v954
        %v1018 = vadd.f32 %v1017, %v955
        %v1019 = vadd.f32 %v1018, %v956
        %v1020 = vadd.f32 %v1019, %v957
        %v1021 = vadd.f32 %v1020, %v958
        %v1022 = vadd.f32 %v1021, %v959
        %v1023 = vadd.f32 %v1022, %v960
        %v1024 = vadd.f32 %v1023, %v961
        %v1025 = vadd.f32 %v1024, %v962
        %v1026 = vadd.f32 %v1025, %v963
        %v1027 = vadd.f32 %v1026, %v964
        %v1028 = vadd.f32 %v1027, %v965
        %v1029 = vadd.f32 %v1028, %v966
        %v1030 = vadd.f32 %v1029, %v967
        %v1031 = vadd.f32 %v1030, %v968
        %v1032 = vadd.f32 %v1031, %v969
        %v1033 = vadd.f32 %v1032, %v970
        %v1034 = vadd.f32 %v1033, %v971
        %v1035 = vadd.f32 %v1034, %v972
        %v1036 = vadd.f32 %v1035, %v973
        %v1037 = vadd.f32 %v1036, %v974
        %v1038 = vadd.f32 %v1037, %v975
        %v1039 = vrot.slane %v1038, 4
        %v1040 = vadd.f32 %v1038, %v1039
        %v1041 = vrot.slane %v1040, 2
        %v1042 = vadd.f32 %v1040, %v1041
        %v1043 = vrot.slane %v1042, 1
        %v1044 = vadd.f32 %v1042, %v1043
        %v1045 = vadd.f32 %v911, %v1044
        %1046 = vst [vmem:[#allocation3] sm:$0x1] %v1045
      $region44: #{cnn_block_forward.1} parent=35 // pred_fallthru
        _
      %p1047 = scmp.eq.s32.totalorder %s19, 1
      %p1048 = pnand %p1047, %p829
      %p1049 = pneg %p1048
      // Predicated region
      $region45: #{cnn_block_forward.1} parent=35 // pred_check
        _
      $region46: #{cnn_block_forward.1} parent=35 // pred_check_branch
        %1051 = sbr.rel (%p1048) target = $region48
      $region47: #{cnn_block_forward.1} parent=35 // pred_region
        %v1052 = vld [vmem:[#allocation2] sm:$0x1]
        %v1053 = vmul.f32 %v1052, 0.001953125
        %v1054 = vld [vmem:[#allocation3] sm:$0x1]
        %v1055 = vmul.f32 %v1054, 0.001953125
        %v1056 = vmul.f32 %v1053, %v1053
        %v1057 = vsub.f32 %v1055, %v1056
        %v1058 = vmax.f32 %v1057, 0.0
        %v1059 = vld [vmem:[%s2] sm:$0x1]
        %v1060 = vadd.f32 %v1058, 1e-05
        %v1061 = vrsqrt.pop %v1060
        %v1062 = vmul.f32 %v1059, %v1061
        %1063 = vst [vmem:[#allocation4] sm:$0x1] %v1062
        %v1064 = vld [vmem:[%s3] sm:$0x1]
        %v1065 = vmul.f32 %v1053, %v1062
        %v1066 = vsub.f32 %v1064, %v1065
        %1067 = vst [vmem:[#allocation5] sm:$0x1] %v1066
      $region48: #{cnn_block_forward.1} parent=35 // pred_fallthru
        _
      // Predicated region
      $region49: #{cnn_block_forward.1} parent=35 // pred_check
        %p1068 = pneg %p1047
      $region50: #{cnn_block_forward.1} parent=35 // pred_check_branch
        %1070 = sbr.rel (%p1068) target = $region52
      $region51: #{cnn_block_forward.1} parent=35 // pred_region
        %v1071 = vld [vmem:[#allocation4] sm:$0x1]
        %v1073 = vlaneseq
        %v1074 = vshrl.u32 %v1073, 7
        %v1075 = vsub.s32 0, %v1074
        %v1076 = vrot.slane %v1071, %v1075
        %v1078 = vmul.f32 %v574, %v1076
        %v1079 = vmul.f32 %v577, %v1076
        %v1080 = vmul.f32 %v582, %v1076
        %v1081 = vmul.f32 %v585, %v1076
        %v1082 = vmul.f32 %v590, %v1076
        %v1083 = vmul.f32 %v593, %v1076
        %v1084 = vmul.f32 %v598, %v1076
        %v1085 = vmul.f32 %v601, %v1076
        %v1086 = vmul.f32 %v606, %v1076
        %v1087 = vmul.f32 %v609, %v1076
        %v1088 = vmul.f32 %v614, %v1076
        %v1089 = vmul.f32 %v617, %v1076
        %v1090 = vmul.f32 %v622, %v1076
        %v1091 = vmul.f32 %v625, %v1076
        %v1092 = vmul.f32 %v630, %v1076
        %v1093 = vmul.f32 %v633, %v1076
        %v1094 = vmul.f32 %v638, %v1076
        %v1095 = vmul.f32 %v641, %v1076
        %v1096 = vmul.f32 %v646, %v1076
        %v1097 = vmul.f32 %v649, %v1076
        %v1098 = vmul.f32 %v654, %v1076
        %v1099 = vmul.f32 %v657, %v1076
        %v1100 = vmul.f32 %v662, %v1076
        %v1101 = vmul.f32 %v665, %v1076
        %v1102 = vmul.f32 %v670, %v1076
        %v1103 = vmul.f32 %v673, %v1076
        %v1104 = vmul.f32 %v678, %v1076
        %v1105 = vmul.f32 %v681, %v1076
        %v1106 = vmul.f32 %v686, %v1076
        %v1107 = vmul.f32 %v689, %v1076
        %v1108 = vmul.f32 %v694, %v1076
        %v1109 = vmul.f32 %v697, %v1076
        %v1110 = vmul.f32 %v702, %v1076
        %v1111 = vmul.f32 %v705, %v1076
        %v1112 = vmul.f32 %v710, %v1076
        %v1113 = vmul.f32 %v713, %v1076
        %v1114 = vmul.f32 %v718, %v1076
        %v1115 = vmul.f32 %v721, %v1076
        %v1116 = vmul.f32 %v726, %v1076
        %v1117 = vmul.f32 %v729, %v1076
        %v1118 = vmul.f32 %v734, %v1076
        %v1119 = vmul.f32 %v737, %v1076
        %v1120 = vmul.f32 %v742, %v1076
        %v1121 = vmul.f32 %v745, %v1076
        %v1122 = vmul.f32 %v750, %v1076
        %v1123 = vmul.f32 %v753, %v1076
        %v1124 = vmul.f32 %v758, %v1076
        %v1125 = vmul.f32 %v761, %v1076
        %v1126 = vmul.f32 %v766, %v1076
        %v1127 = vmul.f32 %v769, %v1076
        %v1128 = vmul.f32 %v774, %v1076
        %v1129 = vmul.f32 %v777, %v1076
        %v1130 = vmul.f32 %v782, %v1076
        %v1131 = vmul.f32 %v785, %v1076
        %v1132 = vmul.f32 %v790, %v1076
        %v1133 = vmul.f32 %v793, %v1076
        %v1134 = vmul.f32 %v798, %v1076
        %v1135 = vmul.f32 %v801, %v1076
        %v1136 = vmul.f32 %v806, %v1076
        %v1137 = vmul.f32 %v809, %v1076
        %v1138 = vmul.f32 %v814, %v1076
        %v1139 = vmul.f32 %v817, %v1076
        %v1140 = vmul.f32 %v822, %v1076
        %v1141 = vmul.f32 %v825, %v1076
        %v1142 = vld [vmem:[#allocation5] sm:$0x1]
        %v1144 = vlaneseq
        %v1145 = vshrl.u32 %v1144, 7
        %v1146 = vsub.s32 0, %v1145
        %v1147 = vrot.slane %v1142, %v1146
        %v1149 = vadd.f32 %v1078, %v1147
        %v1150 = vadd.f32 %v1079, %v1147
        %v1151 = vadd.f32 %v1080, %v1147
        %v1152 = vadd.f32 %v1081, %v1147
        %v1153 = vadd.f32 %v1082, %v1147
        %v1154 = vadd.f32 %v1083, %v1147
        %v1155 = vadd.f32 %v1084, %v1147
        %v1156 = vadd.f32 %v1085, %v1147
        %v1157 = vadd.f32 %v1086, %v1147
        %v1158 = vadd.f32 %v1087, %v1147
        %v1159 = vadd.f32 %v1088, %v1147
        %v1160 = vadd.f32 %v1089, %v1147
        %v1161 = vadd.f32 %v1090, %v1147
        %v1162 = vadd.f32 %v1091, %v1147
        %v1163 = vadd.f32 %v1092, %v1147
        %v1164 = vadd.f32 %v1093, %v1147
        %v1165 = vadd.f32 %v1094, %v1147
        %v1166 = vadd.f32 %v1095, %v1147
        %v1167 = vadd.f32 %v1096, %v1147
        %v1168 = vadd.f32 %v1097, %v1147
        %v1169 = vadd.f32 %v1098, %v1147
        %v1170 = vadd.f32 %v1099, %v1147
        %v1171 = vadd.f32 %v1100, %v1147
        %v1172 = vadd.f32 %v1101, %v1147
        %v1173 = vadd.f32 %v1102, %v1147
        %v1174 = vadd.f32 %v1103, %v1147
        %v1175 = vadd.f32 %v1104, %v1147
        %v1176 = vadd.f32 %v1105, %v1147
        %v1177 = vadd.f32 %v1106, %v1147
        %v1178 = vadd.f32 %v1107, %v1147
        %v1179 = vadd.f32 %v1108, %v1147
        %v1180 = vadd.f32 %v1109, %v1147
        %v1181 = vadd.f32 %v1110, %v1147
        %v1182 = vadd.f32 %v1111, %v1147
        %v1183 = vadd.f32 %v1112, %v1147
        %v1184 = vadd.f32 %v1113, %v1147
        %v1185 = vadd.f32 %v1114, %v1147
        %v1186 = vadd.f32 %v1115, %v1147
        %v1187 = vadd.f32 %v1116, %v1147
        %v1188 = vadd.f32 %v1117, %v1147
        %v1189 = vadd.f32 %v1118, %v1147
        %v1190 = vadd.f32 %v1119, %v1147
        %v1191 = vadd.f32 %v1120, %v1147
        %v1192 = vadd.f32 %v1121, %v1147
        %v1193 = vadd.f32 %v1122, %v1147
        %v1194 = vadd.f32 %v1123, %v1147
        %v1195 = vadd.f32 %v1124, %v1147
        %v1196 = vadd.f32 %v1125, %v1147
        %v1197 = vadd.f32 %v1126, %v1147
        %v1198 = vadd.f32 %v1127, %v1147
        %v1199 = vadd.f32 %v1128, %v1147
        %v1200 = vadd.f32 %v1129, %v1147
        %v1201 = vadd.f32 %v1130, %v1147
        %v1202 = vadd.f32 %v1131, %v1147
        %v1203 = vadd.f32 %v1132, %v1147
        %v1204 = vadd.f32 %v1133, %v1147
        %v1205 = vadd.f32 %v1134, %v1147
        %v1206 = vadd.f32 %v1135, %v1147
        %v1207 = vadd.f32 %v1136, %v1147
        %v1208 = vadd.f32 %v1137, %v1147
        %v1209 = vadd.f32 %v1138, %v1147
        %v1210 = vadd.f32 %v1139, %v1147
        %v1211 = vadd.f32 %v1140, %v1147
        %v1212 = vadd.f32 %v1141, %v1147
        %vm1213 = vcmp.ge.f32.partialorder %v1149, 0.0
        %vm1214 = vcmp.ge.f32.partialorder %v1150, 0.0
        %vm1215 = vcmp.ge.f32.partialorder %v1151, 0.0
        %vm1216 = vcmp.ge.f32.partialorder %v1152, 0.0
        %vm1217 = vcmp.ge.f32.partialorder %v1153, 0.0
        %vm1218 = vcmp.ge.f32.partialorder %v1154, 0.0
        %vm1219 = vcmp.ge.f32.partialorder %v1155, 0.0
        %vm1220 = vcmp.ge.f32.partialorder %v1156, 0.0
        %vm1221 = vcmp.ge.f32.partialorder %v1157, 0.0
        %vm1222 = vcmp.ge.f32.partialorder %v1158, 0.0
        %vm1223 = vcmp.ge.f32.partialorder %v1159, 0.0
        %vm1224 = vcmp.ge.f32.partialorder %v1160, 0.0
        %vm1225 = vcmp.ge.f32.partialorder %v1161, 0.0
        %vm1226 = vcmp.ge.f32.partialorder %v1162, 0.0
        %vm1227 = vcmp.ge.f32.partialorder %v1163, 0.0
        %vm1228 = vcmp.ge.f32.partialorder %v1164, 0.0
        %vm1229 = vcmp.ge.f32.partialorder %v1165, 0.0
        %vm1230 = vcmp.ge.f32.partialorder %v1166, 0.0
        %vm1231 = vcmp.ge.f32.partialorder %v1167, 0.0
        %vm1232 = vcmp.ge.f32.partialorder %v1168, 0.0
        %vm1233 = vcmp.ge.f32.partialorder %v1169, 0.0
        %vm1234 = vcmp.ge.f32.partialorder %v1170, 0.0
        %vm1235 = vcmp.ge.f32.partialorder %v1171, 0.0
        %vm1236 = vcmp.ge.f32.partialorder %v1172, 0.0
        %vm1237 = vcmp.ge.f32.partialorder %v1173, 0.0
        %vm1238 = vcmp.ge.f32.partialorder %v1174, 0.0
        %vm1239 = vcmp.ge.f32.partialorder %v1175, 0.0
        %vm1240 = vcmp.ge.f32.partialorder %v1176, 0.0
        %vm1241 = vcmp.ge.f32.partialorder %v1177, 0.0
        %vm1242 = vcmp.ge.f32.partialorder %v1178, 0.0
        %vm1243 = vcmp.ge.f32.partialorder %v1179, 0.0
        %vm1244 = vcmp.ge.f32.partialorder %v1180, 0.0
        %vm1245 = vcmp.ge.f32.partialorder %v1181, 0.0
        %vm1246 = vcmp.ge.f32.partialorder %v1182, 0.0
        %vm1247 = vcmp.ge.f32.partialorder %v1183, 0.0
        %vm1248 = vcmp.ge.f32.partialorder %v1184, 0.0
        %vm1249 = vcmp.ge.f32.partialorder %v1185, 0.0
        %vm1250 = vcmp.ge.f32.partialorder %v1186, 0.0
        %vm1251 = vcmp.ge.f32.partialorder %v1187, 0.0
        %vm1252 = vcmp.ge.f32.partialorder %v1188, 0.0
        %vm1253 = vcmp.ge.f32.partialorder %v1189, 0.0
        %vm1254 = vcmp.ge.f32.partialorder %v1190, 0.0
        %vm1255 = vcmp.ge.f32.partialorder %v1191, 0.0
        %vm1256 = vcmp.ge.f32.partialorder %v1192, 0.0
        %vm1257 = vcmp.ge.f32.partialorder %v1193, 0.0
        %vm1258 = vcmp.ge.f32.partialorder %v1194, 0.0
        %vm1259 = vcmp.ge.f32.partialorder %v1195, 0.0
        %vm1260 = vcmp.ge.f32.partialorder %v1196, 0.0
        %vm1261 = vcmp.ge.f32.partialorder %v1197, 0.0
        %vm1262 = vcmp.ge.f32.partialorder %v1198, 0.0
        %vm1263 = vcmp.ge.f32.partialorder %v1199, 0.0
        %vm1264 = vcmp.ge.f32.partialorder %v1200, 0.0
        %vm1265 = vcmp.ge.f32.partialorder %v1201, 0.0
        %vm1266 = vcmp.ge.f32.partialorder %v1202, 0.0
        %vm1267 = vcmp.ge.f32.partialorder %v1203, 0.0
        %vm1268 = vcmp.ge.f32.partialorder %v1204, 0.0
        %vm1269 = vcmp.ge.f32.partialorder %v1205, 0.0
        %vm1270 = vcmp.ge.f32.partialorder %v1206, 0.0
        %vm1271 = vcmp.ge.f32.partialorder %v1207, 0.0
        %vm1272 = vcmp.ge.f32.partialorder %v1208, 0.0
        %vm1273 = vcmp.ge.f32.partialorder %v1209, 0.0
        %vm1274 = vcmp.ge.f32.partialorder %v1210, 0.0
        %vm1275 = vcmp.ge.f32.partialorder %v1211, 0.0
        %vm1276 = vcmp.ge.f32.partialorder %v1212, 0.0
        %v1277 = vmul.f32 %v1149, 0.1
        %v1278 = vmul.f32 %v1150, 0.1
        %v1279 = vmul.f32 %v1151, 0.1
        %v1280 = vmul.f32 %v1152, 0.1
        %v1281 = vmul.f32 %v1153, 0.1
        %v1282 = vmul.f32 %v1154, 0.1
        %v1283 = vmul.f32 %v1155, 0.1
        %v1284 = vmul.f32 %v1156, 0.1
        %v1285 = vmul.f32 %v1157, 0.1
        %v1286 = vmul.f32 %v1158, 0.1
        %v1287 = vmul.f32 %v1159, 0.1
        %v1288 = vmul.f32 %v1160, 0.1
        %v1289 = vmul.f32 %v1161, 0.1
        %v1290 = vmul.f32 %v1162, 0.1
        %v1291 = vmul.f32 %v1163, 0.1
        %v1292 = vmul.f32 %v1164, 0.1
        %v1293 = vmul.f32 %v1165, 0.1
        %v1294 = vmul.f32 %v1166, 0.1
        %v1295 = vmul.f32 %v1167, 0.1
        %v1296 = vmul.f32 %v1168, 0.1
        %v1297 = vmul.f32 %v1169, 0.1
        %v1298 = vmul.f32 %v1170, 0.1
        %v1299 = vmul.f32 %v1171, 0.1
        %v1300 = vmul.f32 %v1172, 0.1
        %v1301 = vmul.f32 %v1173, 0.1
        %v1302 = vmul.f32 %v1174, 0.1
        %v1303 = vmul.f32 %v1175, 0.1
        %v1304 = vmul.f32 %v1176, 0.1
        %v1305 = vmul.f32 %v1177, 0.1
        %v1306 = vmul.f32 %v1178, 0.1
        %v1307 = vmul.f32 %v1179, 0.1
        %v1308 = vmul.f32 %v1180, 0.1
        %v1309 = vmul.f32 %v1181, 0.1
        %v1310 = vmul.f32 %v1182, 0.1
        %v1311 = vmul.f32 %v1183, 0.1
        %v1312 = vmul.f32 %v1184, 0.1
        %v1313 = vmul.f32 %v1185, 0.1
        %v1314 = vmul.f32 %v1186, 0.1
        %v1315 = vmul.f32 %v1187, 0.1
        %v1316 = vmul.f32 %v1188, 0.1
        %v1317 = vmul.f32 %v1189, 0.1
        %v1318 = vmul.f32 %v1190, 0.1
        %v1319 = vmul.f32 %v1191, 0.1
        %v1320 = vmul.f32 %v1192, 0.1
        %v1321 = vmul.f32 %v1193, 0.1
        %v1322 = vmul.f32 %v1194, 0.1
        %v1323 = vmul.f32 %v1195, 0.1
        %v1324 = vmul.f32 %v1196, 0.1
        %v1325 = vmul.f32 %v1197, 0.1
        %v1326 = vmul.f32 %v1198, 0.1
        %v1327 = vmul.f32 %v1199, 0.1
        %v1328 = vmul.f32 %v1200, 0.1
        %v1329 = vmul.f32 %v1201, 0.1
        %v1330 = vmul.f32 %v1202, 0.1
        %v1331 = vmul.f32 %v1203, 0.1
        %v1332 = vmul.f32 %v1204, 0.1
        %v1333 = vmul.f32 %v1205, 0.1
        %v1334 = vmul.f32 %v1206, 0.1
        %v1335 = vmul.f32 %v1207, 0.1
        %v1336 = vmul.f32 %v1208, 0.1
        %v1337 = vmul.f32 %v1209, 0.1
        %v1338 = vmul.f32 %v1210, 0.1
        %v1339 = vmul.f32 %v1211, 0.1
        %v1340 = vmul.f32 %v1212, 0.1
        %v1341 = vsel %vm1213, %v1149, %v1277
        %v1342 = vsel %vm1214, %v1150, %v1278
        %v1343 = vsel %vm1215, %v1151, %v1279
        %v1344 = vsel %vm1216, %v1152, %v1280
        %v1345 = vsel %vm1217, %v1153, %v1281
        %v1346 = vsel %vm1218, %v1154, %v1282
        %v1347 = vsel %vm1219, %v1155, %v1283
        %v1348 = vsel %vm1220, %v1156, %v1284
        %v1349 = vsel %vm1221, %v1157, %v1285
        %v1350 = vsel %vm1222, %v1158, %v1286
        %v1351 = vsel %vm1223, %v1159, %v1287
        %v1352 = vsel %vm1224, %v1160, %v1288
        %v1353 = vsel %vm1225, %v1161, %v1289
        %v1354 = vsel %vm1226, %v1162, %v1290
        %v1355 = vsel %vm1227, %v1163, %v1291
        %v1356 = vsel %vm1228, %v1164, %v1292
        %v1357 = vsel %vm1229, %v1165, %v1293
        %v1358 = vsel %vm1230, %v1166, %v1294
        %v1359 = vsel %vm1231, %v1167, %v1295
        %v1360 = vsel %vm1232, %v1168, %v1296
        %v1361 = vsel %vm1233, %v1169, %v1297
        %v1362 = vsel %vm1234, %v1170, %v1298
        %v1363 = vsel %vm1235, %v1171, %v1299
        %v1364 = vsel %vm1236, %v1172, %v1300
        %v1365 = vsel %vm1237, %v1173, %v1301
        %v1366 = vsel %vm1238, %v1174, %v1302
        %v1367 = vsel %vm1239, %v1175, %v1303
        %v1368 = vsel %vm1240, %v1176, %v1304
        %v1369 = vsel %vm1241, %v1177, %v1305
        %v1370 = vsel %vm1242, %v1178, %v1306
        %v1371 = vsel %vm1243, %v1179, %v1307
        %v1372 = vsel %vm1244, %v1180, %v1308
        %v1373 = vsel %vm1245, %v1181, %v1309
        %v1374 = vsel %vm1246, %v1182, %v1310
        %v1375 = vsel %vm1247, %v1183, %v1311
        %v1376 = vsel %vm1248, %v1184, %v1312
        %v1377 = vsel %vm1249, %v1185, %v1313
        %v1378 = vsel %vm1250, %v1186, %v1314
        %v1379 = vsel %vm1251, %v1187, %v1315
        %v1380 = vsel %vm1252, %v1188, %v1316
        %v1381 = vsel %vm1253, %v1189, %v1317
        %v1382 = vsel %vm1254, %v1190, %v1318
        %v1383 = vsel %vm1255, %v1191, %v1319
        %v1384 = vsel %vm1256, %v1192, %v1320
        %v1385 = vsel %vm1257, %v1193, %v1321
        %v1386 = vsel %vm1258, %v1194, %v1322
        %v1387 = vsel %vm1259, %v1195, %v1323
        %v1388 = vsel %vm1260, %v1196, %v1324
        %v1389 = vsel %vm1261, %v1197, %v1325
        %v1390 = vsel %vm1262, %v1198, %v1326
        %v1391 = vsel %vm1263, %v1199, %v1327
        %v1392 = vsel %vm1264, %v1200, %v1328
        %v1393 = vsel %vm1265, %v1201, %v1329
        %v1394 = vsel %vm1266, %v1202, %v1330
        %v1395 = vsel %vm1267, %v1203, %v1331
        %v1396 = vsel %vm1268, %v1204, %v1332
        %v1397 = vsel %vm1269, %v1205, %v1333
        %v1398 = vsel %vm1270, %v1206, %v1334
        %v1399 = vsel %vm1271, %v1207, %v1335
        %v1400 = vsel %vm1272, %v1208, %v1336
        %v1401 = vsel %vm1273, %v1209, %v1337
        %v1402 = vsel %vm1274, %v1210, %v1338
        %v1403 = vsel %vm1275, %v1211, %v1339
        %v1404 = vsel %vm1276, %v1212, %v1340
        %1405 = vst [vmem:[%s215] sm:$0xff] %v1341
        %1406 = vst [vmem:[%s215 + $0x8] sm:$0xff] %v1342
        %1407 = vst [vmem:[%s215 + $0x10] sm:$0xff] %v1343
        %1408 = vst [vmem:[%s215 + $0x18] sm:$0xff] %v1344
        %1409 = vst [vmem:[%s215 + $0x20] sm:$0xff] %v1345
        %1410 = vst [vmem:[%s215 + $0x28] sm:$0xff] %v1346
        %1411 = vst [vmem:[%s215 + $0x30] sm:$0xff] %v1347
        %1412 = vst [vmem:[%s215 + $0x38] sm:$0xff] %v1348
        %1413 = vst [vmem:[%s215 + $0x40] sm:$0xff] %v1349
        %1414 = vst [vmem:[%s215 + $0x48] sm:$0xff] %v1350
        %1415 = vst [vmem:[%s215 + $0x50] sm:$0xff] %v1351
        %1416 = vst [vmem:[%s215 + $0x58] sm:$0xff] %v1352
        %1417 = vst [vmem:[%s215 + $0x60] sm:$0xff] %v1353
        %1418 = vst [vmem:[%s215 + $0x68] sm:$0xff] %v1354
        %1419 = vst [vmem:[%s215 + $0x70] sm:$0xff] %v1355
        %1420 = vst [vmem:[%s215 + $0x78] sm:$0xff] %v1356
        %1421 = vst [vmem:[%s215 + $0x80] sm:$0xff] %v1357
        %1422 = vst [vmem:[%s215 + $0x88] sm:$0xff] %v1358
        %1423 = vst [vmem:[%s215 + $0x90] sm:$0xff] %v1359
        %1424 = vst [vmem:[%s215 + $0x98] sm:$0xff] %v1360
        %1425 = vst [vmem:[%s215 + $0xa0] sm:$0xff] %v1361
        %1426 = vst [vmem:[%s215 + $0xa8] sm:$0xff] %v1362
        %1427 = vst [vmem:[%s215 + $0xb0] sm:$0xff] %v1363
        %1428 = vst [vmem:[%s215 + $0xb8] sm:$0xff] %v1364
        %1429 = vst [vmem:[%s215 + $0xc0] sm:$0xff] %v1365
        %1430 = vst [vmem:[%s215 + $0xc8] sm:$0xff] %v1366
        %1431 = vst [vmem:[%s215 + $0xd0] sm:$0xff] %v1367
        %1432 = vst [vmem:[%s215 + $0xd8] sm:$0xff] %v1368
        %1433 = vst [vmem:[%s215 + $0xe0] sm:$0xff] %v1369
        %1434 = vst [vmem:[%s215 + $0xe8] sm:$0xff] %v1370
        %1435 = vst [vmem:[%s215 + $0xf0] sm:$0xff] %v1371
        %1436 = vst [vmem:[%s215 + $0xf8] sm:$0xff] %v1372
        %1437 = vst [vmem:[%s215 + $0x100] sm:$0xff] %v1373
        %1438 = vst [vmem:[%s215 + $0x108] sm:$0xff] %v1374
        %1439 = vst [vmem:[%s215 + $0x110] sm:$0xff] %v1375
        %1440 = vst [vmem:[%s215 + $0x118] sm:$0xff] %v1376
        %1441 = vst [vmem:[%s215 + $0x120] sm:$0xff] %v1377
        %1442 = vst [vmem:[%s215 + $0x128] sm:$0xff] %v1378
        %1443 = vst [vmem:[%s215 + $0x130] sm:$0xff] %v1379
        %1444 = vst [vmem:[%s215 + $0x138] sm:$0xff] %v1380
        %1445 = vst [vmem:[%s215 + $0x140] sm:$0xff] %v1381
        %1446 = vst [vmem:[%s215 + $0x148] sm:$0xff] %v1382
        %1447 = vst [vmem:[%s215 + $0x150] sm:$0xff] %v1383
        %1448 = vst [vmem:[%s215 + $0x158] sm:$0xff] %v1384
        %1449 = vst [vmem:[%s215 + $0x160] sm:$0xff] %v1385
        %1450 = vst [vmem:[%s215 + $0x168] sm:$0xff] %v1386
        %1451 = vst [vmem:[%s215 + $0x170] sm:$0xff] %v1387
        %1452 = vst [vmem:[%s215 + $0x178] sm:$0xff] %v1388
        %1453 = vst [vmem:[%s215 + $0x180] sm:$0xff] %v1389
        %1454 = vst [vmem:[%s215 + $0x188] sm:$0xff] %v1390
        %1455 = vst [vmem:[%s215 + $0x190] sm:$0xff] %v1391
        %1456 = vst [vmem:[%s215 + $0x198] sm:$0xff] %v1392
        %1457 = vst [vmem:[%s215 + $0x1a0] sm:$0xff] %v1393
        %1458 = vst [vmem:[%s215 + $0x1a8] sm:$0xff] %v1394
        %1459 = vst [vmem:[%s215 + $0x1b0] sm:$0xff] %v1395
        %1460 = vst [vmem:[%s215 + $0x1b8] sm:$0xff] %v1396
        %1461 = vst [vmem:[%s215 + $0x1c0] sm:$0xff] %v1397
        %1462 = vst [vmem:[%s215 + $0x1c8] sm:$0xff] %v1398
        %1463 = vst [vmem:[%s215 + $0x1d0] sm:$0xff] %v1399
        %1464 = vst [vmem:[%s215 + $0x1d8] sm:$0xff] %v1400
        %1465 = vst [vmem:[%s215 + $0x1e0] sm:$0xff] %v1401
        %1466 = vst [vmem:[%s215 + $0x1e8] sm:$0xff] %v1402
        %1467 = vst [vmem:[%s215 + $0x1f0] sm:$0xff] %v1403
        %1468 = vst [vmem:[%s215 + $0x1f8] sm:$0xff] %v1404
      $region52: #{cnn_block_forward.1} parent=35 // pred_fallthru
        _
      %s1469 = smul.u32 %s20, %s19
      %s1470 = smul.u32 64, %s1469
      %p1471 = scmp.lt.s32.totalorder %s1470, 63
      %s1472 = scalar_select %p1471, %s1470, 63
      %s1473 = smul.addr %s1472, 8
      %s1474 = scalar_lea.vmem %s4, %s1473
      // Predicated region
      $region53: #{cnn_block_forward.1} parent=35 // pred_check
        %p1475 = pneg %p136
      $region54: #{cnn_block_forward.1} parent=35 // pred_check_branch
        %1477 = sbr.rel (%p1475) target = $region56
      $region55: #{cnn_block_forward.1} parent=35 // pred_region
        %s1478 = smul.u32 %s20, %s19
        %s1479 = smul.u32 64, %s1478
      $region56: #{cnn_block_forward.1} parent=35 // pred_fallthru
        _
    $region36: #{cnn_block_forward.1} parent=5 // pred_fallthru
      _
    %p1480 = scmp.le.s32.totalorder 2, %s10
    // Predicated region
    $region57: #{cnn_block_forward.1} parent=5 // pred_check
      %p1481 = pneg %p1480
    $region58: #{cnn_block_forward.1} parent=5 // pred_check_branch
      %1483 = sbr.rel (%p1481) target = $region60
    $region59: #{cnn_block_forward.1} parent=5 // pred_region
      %s1484 = ssub.s32 %s10, 2
      // Predicated region
      $region61: #{cnn_block_forward.1} parent=59 // pred_check
        %p1485 = pneg %p142
      $region62: #{cnn_block_forward.1} parent=59 // pred_check_branch
        %1487 = sbr.rel (%p1485) target = $region64
      $region63: #{cnn_block_forward.1} parent=59 // pred_region
        %s1488 = smul.u32 %s22, %s21
        %s1489 = smul.u32 64, %s1488
        %p1490 = scmp.lt.s32.totalorder %s1489, 63
        %s1491 = scalar_select %p1490, %s1489, 63
        %s1492 = smul.addr %s1491, 8
        %s1493 = scalar_lea.vmem %s4, %s1492
      $region64: #{cnn_block_forward.1} parent=59 // pred_fallthru
        _
    $region60: #{cnn_block_forward.1} parent=5 // pred_fallthru
      _
  $region6: #{cnn_block_forward.1} parent=0 // loop_footer
    %s14 = sadd.s32 1, %s10
  $region7: #{cnn_block_forward.1} parent=0 // loop_footer_branch
    %9 = sbr.rel target = $region3
  $region8: #{cnn_block_forward.1} parent=0 // loop_exit
    _

</llo_original>
